<compile_context>
chip_gen: v7x
topology: tpu7x:2x2x1
jax: 0.10.0
libtpu: 0.0.40
codegen_flags: <defaults>
</compile_context>

<pallas_src>
from functools import partial

import jax
import jax.numpy as jnp
from jax.experimental import pallas as pl
from jax.experimental.pallas import tpu as pltpu

_BN_EPS = 1e-5
_LANE = 128


# ----------------------------- Pallas kernel -------------------------------

def _cmdfb_kernel(x_ref, y_ref, wcc_ref, w3_ref, wic_ref, wci_ref,
                  bc_ref, bi_ref, xo_ref, yo_ref):
    # x_ref, y_ref : (Nb, C, HW)  batch block, channels-first, HW on lanes
    # wcc_ref      : (2, C, C)    [pw1*bn, pw2*bn]                     (bf16)
    # w3_ref       : (C, 2C)      pw3 weight (x-half | y-half)         (bf16)
    # wic_ref      : (4, Ci, C)   first conv of [fl, fg, sl, sg]       (bf16, BN folded)
    # wci_ref      : (4, C, Ci)   second conv of [fl, fg, sl, sg]      (bf16, BN folded)
    # bc_ref       : (7, C, 1)    [pw1, pw2, pw3, fl2, fg2, sl2, sg2]  shifts (f32)
    # bi_ref       : (4, Ci, 1)   [fl1, fg1, sl1, sg1]                 shifts (f32)
    f32 = jnp.float32
    nb, C, HW = x_ref.shape

    # Weights are tiny: load once per grid step, shared by all Nb elements.
    w_pw1, w_pw2 = wcc_ref[0], wcc_ref[1]
    w_pw3 = w3_ref[...]
    w_fl1, w_fg1, w_sl1, w_sg1 = wic_ref[0], wic_ref[1], wic_ref[2], wic_ref[3]
    w_fl2, w_fg2, w_sl2, w_sg2 = wci_ref[0], wci_ref[1], wci_ref[2], wci_ref[3]
    b_pw1, b_pw2, b_pw3 = bc_ref[0], bc_ref[1], bc_ref[2]
    b_fl2, b_fg2, b_sl2, b_sg2 = bc_ref[3], bc_ref[4], bc_ref[5], bc_ref[6]
    b_fl1, b_fg1, b_sl1, b_sg1 = bi_ref[0], bi_ref[1], bi_ref[2], bi_ref[3]

    mm_dtype = w_pw1.dtype  # bf16 by default: MXU-native inputs, f32 accumulation

    def mm(w, v):
        return jnp.dot(w, v.astype(mm_dtype), preferred_element_type=f32)

    def affine(w, b, v):                       # 1x1 conv (+ folded BN) == matmul + shift
        return mm(w, v) + b

    def sigmoid(v):                            # exp + approx-reciprocal ride the EUP slot
        return pl.reciprocal(1.0 + jnp.exp(-v), approx=True)

    def branch(v, w1, b1, w2, b2):             # conv+bn -> relu -> conv+bn
        h = jnp.maximum(affine(w1, b1, v), 0.0)
        return affine(w2, b2, h)

    def pooled(v):                             # global avg pool kept on ONE lane tile
        return jnp.broadcast_to(jnp.mean(v, axis=1, keepdims=True), (C, _LANE))

    for n in range(nb):                        # static unroll over the batch block
        # pw1 + bn -> relu -> pw2 + bn   (re-read x/y per use site: short live ranges)
        xy = x_ref[n].astype(f32) + y_ref[n].astype(f32)
        t = jnp.maximum(affine(w_pw1, b_pw1, xy), 0.0)
        conv_out = affine(w_pw2, b_pw2, t)

        # first local / global attention; global branch runs at width 128, not HW
        local1 = sigmoid(branch(conv_out, w_fl1, b_fl1, w_fl2, b_fl2))
        global1 = sigmoid(branch(pooled(conv_out), w_fg1, b_fg1, w_fg2, b_fg2))[:, 0:1]
        lg = local1 + global1                  # (C,1) broadcast-add over lanes

        # pw3 on the channel-concat == ONE (C,2C)x(2C,HW) matmul (sublane concat)
        cat = jnp.concatenate([x_ref[n].astype(f32) + lg,
                               y_ref[n].astype(f32) + lg], axis=0)
        t2 = affine(w_pw3, b_pw3, cat)

        # second local / global attention (no terminal sigmoid inside the branch)
        local2 = branch(t2, w_sl1, b_sl1, w_sl2, b_sl2)
        global2 = branch(pooled(t2), w_sg1, b_sg1, w_sg2, b_sg2)[:, 0:1]
        a = sigmoid(local2 + global2)

        # re-read x/y from the resident VMEM block for the final stores
        xo_ref[n] = (x_ref[n].astype(f32) * a).astype(xo_ref.dtype)
        yo_ref[n] = (y_ref[n].astype(f32) * (1.0 - a)).astype(yo_ref.dtype)


# ----------------------------- wrapper (glue) -------------------------------

def _bn_scale_shift(bn):
    gamma, beta, mean, var = bn
    a = gamma * jax.lax.rsqrt(var + _BN_EPS)
    return a, beta - a * mean


def _fold_conv_bn(w, b, bn):
    """BN(W x + b) == (a*W) x + (a*b + d)  (inference-mode BN)."""
    a, d = _bn_scale_shift(bn)
    return a[:, None] * w, a * b + d


def prepare_cmdfb_params(p, matmul_dtype=jnp.bfloat16):
    """Fold every Conv->BN pair and stack weights ONCE (hoisted out of per-call path)."""
    f32 = jnp.float32
    w_pw1, b_pw1 = _fold_conv_bn(p["pw1_w"], p["pw1_b"], p["bn"])
    w_pw2, b_pw2 = _fold_conv_bn(p["pw2_w"], p["pw2_b"], p["bn"])

    def fold_branch(br):
        w1, b1 = _fold_conv_bn(br["w1"], br["b1"], br["bn1"])
        w2, b2 = _fold_conv_bn(br["w2"], br["b2"], br["bn2"])
        return w1, b1, w2, b2

    fl = fold_branch(p["fl"])
    fg = fold_branch(p["fg"])
    sl = fold_branch(p["sl"])
    sg = fold_branch(p["sg"])

    wcc = jnp.stack([w_pw1, w_pw2]).astype(matmul_dtype)                # (2, C, C)
    w3 = p["pw3_w"].astype(matmul_dtype)                                # (C, 2C)
    wic = jnp.stack([fl[0], fg[0], sl[0], sg[0]]).astype(matmul_dtype)  # (4, Ci, C)
    wci = jnp.stack([fl[2], fg[2], sl[2], sg[2]]).astype(matmul_dtype)  # (4, C, Ci)
    bc = jnp.stack([b_pw1, b_pw2, p["pw3_b"],
                    fl[3], fg[3], sl[3], sg[3]]).astype(f32)[:, :, None]   # (7, C, 1)
    bi = jnp.stack([fl[1], fg[1], sl[1], sg[1]]).astype(f32)[:, :, None]   # (4, Ci, 1)
    return dict(wcc=wcc, w3=w3, wic=wic, wci=wci, bc=bc, bi=bi)


@partial(jax.jit, static_argnames=("batch_block",))
def cmdfb_forward(x, y, packed, batch_block=None):
    """CMDFB.forward(x, y) -> (x_out, y_out). x, y: (N, C, H, W)."""
    N, C, H, W = x.shape
    HW = H * W
    assert C % 8 == 0 and HW % 128 == 0, "TODO(synk): pad C/HW to (8,128) tiles"

    if batch_block is None:
        # Keep >=2 grid steps when N >= 2 (feeds both v7x TensorCores); pick the
        # largest divisor of N that still leaves >=2 steps.  On single-TC v5e/v6e
        # pass batch_block=N explicitly for one fat step.
        batch_block = 1
        for d in range(max(N // 2, 1), 0, -1):
            if N % d == 0:
                batch_block = d
                break
    assert N % batch_block == 0
    nb = batch_block
    grid = (N // nb,)

    # NCHW -> (N, C, HW): pure reshape, no transpose pass over HBM.
    x2 = x.reshape(N, C, HW)
    y2 = y.reshape(N, C, HW)

    def full_spec(shape):
        zeros = (0,) * len(shape)
        return pl.BlockSpec(shape, lambda i: zeros)

    batch_spec = pl.BlockSpec((nb, C, HW), lambda i: (i, 0, 0))

    x_out, y_out = pl.pallas_call(
        _cmdfb_kernel,
        out_shape=(jax.ShapeDtypeStruct((N, C, HW), x.dtype),
                   jax.ShapeDtypeStruct((N, C, HW), y.dtype)),
        grid=grid,
        in_specs=[
            batch_spec,                       # x
            batch_spec,                       # y
            full_spec(packed["wcc"].shape),   # (2, C, C)
            full_spec(packed["w3"].shape),    # (C, 2C)
            full_spec(packed["wic"].shape),   # (4, Ci, C)
            full_spec(packed["wci"].shape),   # (4, C, Ci)
            full_spec(packed["bc"].shape),    # (7, C, 1)
            full_spec(packed["bi"].shape),    # (4, Ci, 1)
        ],
        out_specs=(batch_spec, batch_spec),
        compiler_params=pltpu.CompilerParams(
            dimension_semantics=("parallel",),
            vmem_limit_bytes=32 * 1024 * 1024,
        ),
    )(x2, y2, packed["wcc"], packed["w3"], packed["wic"], packed["wci"],
      packed["bc"], packed["bi"])

    return x_out.reshape(N, C, H, W), y_out.reshape(N, C, H, W)


# ----------------------------- pure-JAX reference ---------------------------

def _reference(x, y, p):
    hi = jax.lax.Precision.HIGHEST

    def conv(v, w, b=None):
        out = jnp.einsum("oi,nihw->nohw", w, v, precision=hi)
        if b is not None:
            out = out + b[None, :, None, None]
        return out

    def bn(v, prm):
        g, be, m, var = prm
        a = g / jnp.sqrt(var + _BN_EPS)
        return (v - m[None, :, None, None]) * a[None, :, None, None] \
            + be[None, :, None, None]

    def att_local(v, br):
        h = jax.nn.relu(bn(conv(v, br["w1"], br["b1"]), br["bn1"]))
        return bn(conv(h, br["w2"], br["b2"]), br["bn2"])

    def att_global(v, br):
        g_ = jnp.mean(v, axis=(2, 3), keepdims=True)
        h = jax.nn.relu(bn(conv(g_, br["w1"], br["b1"]), br["bn1"]))
        return bn(conv(h, br["w2"], br["b2"]), br["bn2"])

    t = x + y
    t = jax.nn.relu(bn(conv(t, p["pw1_w"], p["pw1_b"]), p["bn"]))
    conv_out = bn(conv(t, p["pw2_w"], p["pw2_b"]), p["bn"])
    local1 = jax.nn.sigmoid(att_local(conv_out, p["fl"]))
    global1 = jax.nn.sigmoid(att_global(conv_out, p["fg"]))
    lg = local1 + global1
    xi2 = x + lg
    yi2 = y + lg
    cat = jnp.concatenate([xi2, yi2], axis=1)
    t2 = conv(cat, p["pw3_w"], p["pw3_b"])
    local2 = att_local(t2, p["sl"])
    global2 = att_global(t2, p["sg"])
    a = jax.nn.sigmoid(local2 + global2)
    return x * a, y * (1.0 - a)


# ----------------------------- params & main --------------------------------

def _init_params(key, C, r=4):
    Ci = C // r
    ks = iter(jax.random.split(key, 64))

    def w(shape, scale=0.3):
        return scale * jax.random.normal(next(ks), shape, jnp.float32)

    def bn_p(ch):
        return (1.0 + 0.1 * jax.random.normal(next(ks), (ch,), jnp.float32),  # gamma
                0.1 * jax.random.normal(next(ks), (ch,), jnp.float32),        # beta
                0.1 * jax.random.normal(next(ks), (ch,), jnp.float32),        # running_mean
                0.5 + jax.random.uniform(next(ks), (ch,), jnp.float32))       # running_var

    def att_branch():
        return dict(w1=w((Ci, C)), b1=w((Ci,), 0.1), bn1=bn_p(Ci),
                    w2=w((C, Ci)), b2=w((C,), 0.1), bn2=bn_p(C))

    return dict(
        pw1_w=w((C, C)), pw1_b=w((C,), 0.1),
        bn=bn_p(C),
        pw2_w=w((C, C)), pw2_b=w((C,), 0.1),
        pw3_w=w((C, 2 * C)), pw3_b=w((C,), 0.1),
        fl=att_branch(), fg=att_branch(), sl=att_branch(), sg=att_branch(),
    )


if __name__ == "__main__":
    key = jax.random.PRNGKey(0)
    k_x, k_y, k_p = jax.random.split(key, 3)

    N, C, H, W = 2, 16, 16, 16      # in_channels=16, r=4 -> inter_channels=4
    x = jax.random.normal(k_x, (N, C, H, W), dtype=jnp.float32)
    y = jax.random.normal(k_y, (N, C, H, W), dtype=jnp.float32)
    params = _init_params(k_p, C, r=4)

    # Fold Conv+BN and stack weights once (not in the per-forward path).
    packed = prepare_cmdfb_params(params)

    # Default: batch_block=1 -> 2 parallel grid steps (both v7x TensorCores busy).
    x_out, y_out = jax.block_until_ready(cmdfb_forward(x, y, packed))
    # Fully packed batch: one fat grid step (best on single-TC v5e / v6e).
    x_out2, y_out2 = jax.block_until_ready(cmdfb_forward(x, y, packed, batch_block=2))

    x_ref, y_ref = jax.block_until_ready(_reference(x, y, params))

    assert x_out.shape == (N, C, H, W) and y_out.shape == (N, C, H, W)
    # Kernel uses bf16 MXU inputs (explicit precision choice per perf review);
    # tolerance vs. the f32/HIGHEST reference reflects bf16 rounding.
    TOL = dict(atol=5e-2, rtol=5e-2)
    assert jnp.allclose(x_out, x_ref, **TOL), "x_out mismatch"
    assert jnp.allclose(y_out, y_ref, **TOL), "y_out mismatch"
    assert jnp.allclose(x_out2, x_ref, **TOL), "x_out (packed batch) mismatch"
    assert jnp.allclose(y_out2, y_ref, **TOL), "y_out (packed batch) mismatch"
    assert jnp.allclose(x_out, x_out2, atol=1e-5, rtol=1e-5), "batch_block paths differ"

    print("KERNEL_OK")
</pallas_src>

<mosaic_0001>
module attributes {stable_mosaic.version = 11 : i64} {
  func.func @_cmdfb_kernel(%arg0: i32, %arg1: memref<1x16x256xf32, #tpu.memory_space<vmem>>, %arg2: memref<1x16x256xf32, #tpu.memory_space<vmem>>, %arg3: memref<2x16x16xbf16, #tpu.memory_space<vmem>>, %arg4: memref<16x32xbf16, #tpu.memory_space<vmem>>, %arg5: memref<4x4x16xbf16, #tpu.memory_space<vmem>>, %arg6: memref<4x16x4xbf16, #tpu.memory_space<vmem>>, %arg7: memref<7x16x1xf32, #tpu.memory_space<vmem>>, %arg8: memref<4x4x1xf32, #tpu.memory_space<vmem>>, %arg9: memref<1x16x256xf32, #tpu.memory_space<vmem>>, %arg10: memref<1x16x256xf32, #tpu.memory_space<vmem>>) attributes {dimension_semantics = [#tpu.dimension_semantics<parallel>], iteration_bounds = array<i64: 2>, scalar_prefetch = 0 : i64, scratch_operands = 0 : i64, tpu.core_type = #tpu.core_type<tc>, window_params = [{transform_indices = @transform_0, window_bounds = array<i64: 1, 16, 256>}, {transform_indices = @transform_1, window_bounds = array<i64: 1, 16, 256>}, {pipeline_mode = #tpu.pipeline_mode<synchronous>, transform_indices = @transform_2, window_bounds = array<i64: 2, 16, 16>}, {pipeline_mode = #tpu.pipeline_mode<synchronous>, transform_indices = @transform_3, window_bounds = array<i64: 16, 32>}, {pipeline_mode = #tpu.pipeline_mode<synchronous>, transform_indices = @transform_4, window_bounds = array<i64: 4, 4, 16>}, {pipeline_mode = #tpu.pipeline_mode<synchronous>, transform_indices = @transform_5, window_bounds = array<i64: 4, 16, 4>}, {pipeline_mode = #tpu.pipeline_mode<synchronous>, transform_indices = @transform_6, window_bounds = array<i64: 7, 16, 1>}, {pipeline_mode = #tpu.pipeline_mode<synchronous>, transform_indices = @transform_7, window_bounds = array<i64: 4, 4, 1>}, {transform_indices = @transform_8, window_bounds = array<i64: 1, 16, 256>}, {transform_indices = @transform_9, window_bounds = array<i64: 1, 16, 256>}]} {
    %c0 = arith.constant 0 : index
    %c0_0 = arith.constant 0 : index
    %c0_1 = arith.constant 0 : index
    %0 = vector.load %arg3[%c0, %c0_0, %c0_1] : memref<2x16x16xbf16, #tpu.memory_space<vmem>>, vector<1x16x16xbf16>
    %1 = vector.shape_cast %0 : vector<1x16x16xbf16> to vector<16x16xbf16>
    %c1 = arith.constant 1 : index
    %c0_2 = arith.constant 0 : index
    %c0_3 = arith.constant 0 : index
    %2 = vector.load %arg3[%c1, %c0_2, %c0_3] : memref<2x16x16xbf16, #tpu.memory_space<vmem>>, vector<1x16x16xbf16>
    %3 = vector.shape_cast %2 : vector<1x16x16xbf16> to vector<16x16xbf16>
    %c0_4 = arith.constant 0 : index
    %c0_5 = arith.constant 0 : index
    %4 = vector.load %arg4[%c0_4, %c0_5] : memref<16x32xbf16, #tpu.memory_space<vmem>>, vector<16x32xbf16>
    %c0_6 = arith.constant 0 : index
    %c0_7 = arith.constant 0 : index
    %c0_8 = arith.constant 0 : index
    %5 = vector.load %arg5[%c0_6, %c0_7, %c0_8] : memref<4x4x16xbf16, #tpu.memory_space<vmem>>, vector<1x4x16xbf16>
    %6 = vector.shape_cast %5 : vector<1x4x16xbf16> to vector<4x16xbf16>
    %c1_9 = arith.constant 1 : index
    %c0_10 = arith.constant 0 : index
    %c0_11 = arith.constant 0 : index
    %7 = vector.load %arg5[%c1_9, %c0_10, %c0_11] : memref<4x4x16xbf16, #tpu.memory_space<vmem>>, vector<1x4x16xbf16>
    %8 = vector.shape_cast %7 : vector<1x4x16xbf16> to vector<4x16xbf16>
    %c2 = arith.constant 2 : index
    %c0_12 = arith.constant 0 : index
    %c0_13 = arith.constant 0 : index
    %9 = vector.load %arg5[%c2, %c0_12, %c0_13] : memref<4x4x16xbf16, #tpu.memory_space<vmem>>, vector<1x4x16xbf16>
    %10 = vector.shape_cast %9 : vector<1x4x16xbf16> to vector<4x16xbf16>
    %c3 = arith.constant 3 : index
    %c0_14 = arith.constant 0 : index
    %c0_15 = arith.constant 0 : index
    %11 = vector.load %arg5[%c3, %c0_14, %c0_15] : memref<4x4x16xbf16, #tpu.memory_space<vmem>>, vector<1x4x16xbf16>
    %12 = vector.shape_cast %11 : vector<1x4x16xbf16> to vector<4x16xbf16>
    %c0_16 = arith.constant 0 : index
    %c0_17 = arith.constant 0 : index
    %c0_18 = arith.constant 0 : index
    %13 = vector.load %arg6[%c0_16, %c0_17, %c0_18] : memref<4x16x4xbf16, #tpu.memory_space<vmem>>, vector<1x16x4xbf16>
    %14 = vector.shape_cast %13 : vector<1x16x4xbf16> to vector<16x4xbf16>
    %c1_19 = arith.constant 1 : index
    %c0_20 = arith.constant 0 : index
    %c0_21 = arith.constant 0 : index
    %15 = vector.load %arg6[%c1_19, %c0_20, %c0_21] : memref<4x16x4xbf16, #tpu.memory_space<vmem>>, vector<1x16x4xbf16>
    %16 = vector.shape_cast %15 : vector<1x16x4xbf16> to vector<16x4xbf16>
    %c2_22 = arith.constant 2 : index
    %c0_23 = arith.constant 0 : index
    %c0_24 = arith.constant 0 : index
    %17 = vector.load %arg6[%c2_22, %c0_23, %c0_24] : memref<4x16x4xbf16, #tpu.memory_space<vmem>>, vector<1x16x4xbf16>
    %18 = vector.shape_cast %17 : vector<1x16x4xbf16> to vector<16x4xbf16>
    %c3_25 = arith.constant 3 : index
    %c0_26 = arith.constant 0 : index
    %c0_27 = arith.constant 0 : index
    %19 = vector.load %arg6[%c3_25, %c0_26, %c0_27] : memref<4x16x4xbf16, #tpu.memory_space<vmem>>, vector<1x16x4xbf16>
    %20 = vector.shape_cast %19 : vector<1x16x4xbf16> to vector<16x4xbf16>
    %c0_28 = arith.constant 0 : index
    %c0_29 = arith.constant 0 : index
    %c0_30 = arith.constant 0 : index
    %21 = vector.load %arg7[%c0_28, %c0_29, %c0_30] : memref<7x16x1xf32, #tpu.memory_space<vmem>>, vector<1x16x1xf32>
    %22 = vector.shape_cast %21 : vector<1x16x1xf32> to vector<16x1xf32>
    %c1_31 = arith.constant 1 : index
    %c0_32 = arith.constant 0 : index
    %c0_33 = arith.constant 0 : index
    %23 = vector.load %arg7[%c1_31, %c0_32, %c0_33] : memref<7x16x1xf32, #tpu.memory_space<vmem>>, vector<1x16x1xf32>
    %24 = vector.shape_cast %23 : vector<1x16x1xf32> to vector<16x1xf32>
    %c2_34 = arith.constant 2 : index
    %c0_35 = arith.constant 0 : index
    %c0_36 = arith.constant 0 : index
    %25 = vector.load %arg7[%c2_34, %c0_35, %c0_36] : memref<7x16x1xf32, #tpu.memory_space<vmem>>, vector<1x16x1xf32>
    %26 = vector.shape_cast %25 : vector<1x16x1xf32> to vector<16x1xf32>
    %c3_37 = arith.constant 3 : index
    %c0_38 = arith.constant 0 : index
    %c0_39 = arith.constant 0 : index
    %27 = vector.load %arg7[%c3_37, %c0_38, %c0_39] : memref<7x16x1xf32, #tpu.memory_space<vmem>>, vector<1x16x1xf32>
    %28 = vector.shape_cast %27 : vector<1x16x1xf32> to vector<16x1xf32>
    %c4 = arith.constant 4 : index
    %c0_40 = arith.constant 0 : index
    %c0_41 = arith.constant 0 : index
    %29 = vector.load %arg7[%c4, %c0_40, %c0_41] : memref<7x16x1xf32, #tpu.memory_space<vmem>>, vector<1x16x1xf32>
    %30 = vector.shape_cast %29 : vector<1x16x1xf32> to vector<16x1xf32>
    %c5 = arith.constant 5 : index
    %c0_42 = arith.constant 0 : index
    %c0_43 = arith.constant 0 : index
    %31 = vector.load %arg7[%c5, %c0_42, %c0_43] : memref<7x16x1xf32, #tpu.memory_space<vmem>>, vector<1x16x1xf32>
    %32 = vector.shape_cast %31 : vector<1x16x1xf32> to vector<16x1xf32>
    %c6 = arith.constant 6 : index
    %c0_44 = arith.constant 0 : index
    %c0_45 = arith.constant 0 : index
    %33 = vector.load %arg7[%c6, %c0_44, %c0_45] : memref<7x16x1xf32, #tpu.memory_space<vmem>>, vector<1x16x1xf32>
    %34 = vector.shape_cast %33 : vector<1x16x1xf32> to vector<16x1xf32>
    %c0_46 = arith.constant 0 : index
    %c0_47 = arith.constant 0 : index
    %c0_48 = arith.constant 0 : index
    %35 = vector.load %arg8[%c0_46, %c0_47, %c0_48] : memref<4x4x1xf32, #tpu.memory_space<vmem>>, vector<1x4x1xf32>
    %36 = vector.shape_cast %35 : vector<1x4x1xf32> to vector<4x1xf32>
    %c1_49 = arith.constant 1 : index
    %c0_50 = arith.constant 0 : index
    %c0_51 = arith.constant 0 : index
    %37 = vector.load %arg8[%c1_49, %c0_50, %c0_51] : memref<4x4x1xf32, #tpu.memory_space<vmem>>, vector<1x4x1xf32>
    %38 = vector.shape_cast %37 : vector<1x4x1xf32> to vector<4x1xf32>
    %c2_52 = arith.constant 2 : index
    %c0_53 = arith.constant 0 : index
    %c0_54 = arith.constant 0 : index
    %39 = vector.load %arg8[%c2_52, %c0_53, %c0_54] : memref<4x4x1xf32, #tpu.memory_space<vmem>>, vector<1x4x1xf32>
    %40 = vector.shape_cast %39 : vector<1x4x1xf32> to vector<4x1xf32>
    %c3_55 = arith.constant 3 : index
    %c0_56 = arith.constant 0 : index
    %c0_57 = arith.constant 0 : index
    %41 = vector.load %arg8[%c3_55, %c0_56, %c0_57] : memref<4x4x1xf32, #tpu.memory_space<vmem>>, vector<1x4x1xf32>
    %42 = vector.shape_cast %41 : vector<1x4x1xf32> to vector<4x1xf32>
    %c0_58 = arith.constant 0 : index
    %c0_59 = arith.constant 0 : index
    %c0_60 = arith.constant 0 : index
    %43 = vector.load %arg1[%c0_58, %c0_59, %c0_60] : memref<1x16x256xf32, #tpu.memory_space<vmem>>, vector<1x16x256xf32>
    %44 = vector.shape_cast %43 : vector<1x16x256xf32> to vector<16x256xf32>
    %c0_61 = arith.constant 0 : index
    %c0_62 = arith.constant 0 : index
    %c0_63 = arith.constant 0 : index
    %45 = vector.load %arg2[%c0_61, %c0_62, %c0_63] : memref<1x16x256xf32, #tpu.memory_space<vmem>>, vector<1x16x256xf32>
    %46 = vector.shape_cast %45 : vector<1x16x256xf32> to vector<16x256xf32>
    %47 = arith.addf %44, %46 : vector<16x256xf32>
    %48 = arith.truncf %47 : vector<16x256xf32> to vector<16x256xbf16>
    %cst = arith.constant dense<0.000000e+00> : vector<16x256xf32>
    %49 = tpu.matmul %1, %48, %cst {dimension_numbers = #tpu.dot_dimension_numbers<[1], [0], [0], [1], [0, 0, 1, 1], [], []>} : vector<16x16xbf16>, vector<16x256xbf16>, vector<16x256xf32> -> vector<16x256xf32>
    %50 = vector.broadcast %22 : vector<16x1xf32> to vector<16x256xf32>
    %51 = arith.addf %49, %50 : vector<16x256xf32>
    %cst_64 = arith.constant 0.000000e+00 : f32
    %52 = vector.broadcast %cst_64 : f32 to vector<16x256xf32>
    %53 = arith.maximumf %51, %52 : vector<16x256xf32>
    %54 = arith.truncf %53 : vector<16x256xf32> to vector<16x256xbf16>
    %cst_65 = arith.constant dense<0.000000e+00> : vector<16x256xf32>
    %55 = tpu.matmul %3, %54, %cst_65 {dimension_numbers = #tpu.dot_dimension_numbers<[1], [0], [0], [1], [0, 0, 1, 1], [], []>} : vector<16x16xbf16>, vector<16x256xbf16>, vector<16x256xf32> -> vector<16x256xf32>
    %56 = vector.broadcast %24 : vector<16x1xf32> to vector<16x256xf32>
    %57 = arith.addf %55, %56 : vector<16x256xf32>
    %58 = arith.truncf %57 : vector<16x256xf32> to vector<16x256xbf16>
    %cst_66 = arith.constant dense<0.000000e+00> : vector<4x256xf32>
    %59 = tpu.matmul %6, %58, %cst_66 {dimension_numbers = #tpu.dot_dimension_numbers<[1], [0], [0], [1], [0, 0, 1, 1], [], []>} : vector<4x16xbf16>, vector<16x256xbf16>, vector<4x256xf32> -> vector<4x256xf32>
    %60 = vector.broadcast %36 : vector<4x1xf32> to vector<4x256xf32>
    %61 = arith.addf %59, %60 : vector<4x256xf32>
    %cst_67 = arith.constant 0.000000e+00 : f32
    %62 = vector.broadcast %cst_67 : f32 to vector<4x256xf32>
    %63 = arith.maximumf %61, %62 : vector<4x256xf32>
    %64 = arith.truncf %63 : vector<4x256xf32> to vector<4x256xbf16>
    %cst_68 = arith.constant dense<0.000000e+00> : vector<16x256xf32>
    %65 = tpu.matmul %14, %64, %cst_68 {dimension_numbers = #tpu.dot_dimension_numbers<[1], [0], [0], [1], [0, 0, 1, 1], [], []>} : vector<16x4xbf16>, vector<4x256xbf16>, vector<16x256xf32> -> vector<16x256xf32>
    %66 = vector.broadcast %28 : vector<16x1xf32> to vector<16x256xf32>
    %67 = arith.addf %65, %66 : vector<16x256xf32>
    %cst_69 = arith.constant 0.000000e+00 : f32
    %68 = vector.broadcast %cst_69 : f32 to vector<16x256xf32>
    %69 = arith.subf %68, %67 : vector<16x256xf32>
    %70 = math.exp %69 : vector<16x256xf32>
    %cst_70 = arith.constant 1.000000e+00 : f32
    %71 = vector.broadcast %cst_70 : f32 to vector<16x256xf32>
    %72 = arith.addf %71, %70 : vector<16x256xf32>
    %73 = tpu.reciprocal %72 {approx = true} : vector<16x256xf32> -> vector<16x256xf32>
    %cst_71 = arith.constant dense<0.000000e+00> : vector<16xf32>
    %74 = vector.multi_reduction <add>, %57, %cst_71 [1] : vector<16x256xf32> to vector<16xf32>
    %75 = vector.shape_cast %74 : vector<16xf32> to vector<16x1xf32>
    %cst_72 = arith.constant 2.560000e+02 : f32
    %76 = vector.broadcast %cst_72 : f32 to vector<16x1xf32>
    %77 = arith.divf %75, %76 : vector<16x1xf32>
    %78 = vector.shape_cast %77 : vector<16x1xf32> to vector<16x1xf32>
    %79 = vector.broadcast %78 : vector<16x1xf32> to vector<16x128xf32>
    %80 = arith.truncf %79 : vector<16x128xf32> to vector<16x128xbf16>
    %cst_73 = arith.constant dense<0.000000e+00> : vector<4x128xf32>
    %81 = tpu.matmul %8, %80, %cst_73 {dimension_numbers = #tpu.dot_dimension_numbers<[1], [0], [0], [1], [0, 0, 1, 1], [], []>} : vector<4x16xbf16>, vector<16x128xbf16>, vector<4x128xf32> -> vector<4x128xf32>
    %82 = vector.broadcast %38 : vector<4x1xf32> to vector<4x128xf32>
    %83 = arith.addf %81, %82 : vector<4x128xf32>
    %cst_74 = arith.constant 0.000000e+00 : f32
    %84 = vector.broadcast %cst_74 : f32 to vector<4x128xf32>
    %85 = arith.maximumf %83, %84 : vector<4x128xf32>
    %86 = arith.truncf %85 : vector<4x128xf32> to vector<4x128xbf16>
    %cst_75 = arith.constant dense<0.000000e+00> : vector<16x128xf32>
    %87 = tpu.matmul %16, %86, %cst_75 {dimension_numbers = #tpu.dot_dimension_numbers<[1], [0], [0], [1], [0, 0, 1, 1], [], []>} : vector<16x4xbf16>, vector<4x128xbf16>, vector<16x128xf32> -> vector<16x128xf32>
    %88 = vector.broadcast %30 : vector<16x1xf32> to vector<16x128xf32>
    %89 = arith.addf %87, %88 : vector<16x128xf32>
    %cst_76 = arith.constant 0.000000e+00 : f32
    %90 = vector.broadcast %cst_76 : f32 to vector<16x128xf32>
    %91 = arith.subf %90, %89 : vector<16x128xf32>
    %92 = math.exp %91 : vector<16x128xf32>
    %cst_77 = arith.constant 1.000000e+00 : f32
    %93 = vector.broadcast %cst_77 : f32 to vector<16x128xf32>
    %94 = arith.addf %93, %92 : vector<16x128xf32>
    %95 = tpu.reciprocal %94 {approx = true} : vector<16x128xf32> -> vector<16x128xf32>
    %96 = vector.extract_strided_slice %95 {offsets = [0, 0], sizes = [16, 1], strides = [1, 1]} : vector<16x128xf32> to vector<16x1xf32>
    %97 = vector.broadcast %96 : vector<16x1xf32> to vector<16x256xf32>
    %98 = arith.addf %73, %97 : vector<16x256xf32>
    %c0_78 = arith.constant 0 : index
    %c0_79 = arith.constant 0 : index
    %c0_80 = arith.constant 0 : index
    %99 = vector.load %arg1[%c0_78, %c0_79, %c0_80] : memref<1x16x256xf32, #tpu.memory_space<vmem>>, vector<1x16x256xf32>
    %100 = vector.shape_cast %99 : vector<1x16x256xf32> to vector<16x256xf32>
    %101 = arith.addf %100, %98 : vector<16x256xf32>
    %c0_81 = arith.constant 0 : index
    %c0_82 = arith.constant 0 : index
    %c0_83 = arith.constant 0 : index
    %102 = vector.load %arg2[%c0_81, %c0_82, %c0_83] : memref<1x16x256xf32, #tpu.memory_space<vmem>>, vector<1x16x256xf32>
    %103 = vector.shape_cast %102 : vector<1x16x256xf32> to vector<16x256xf32>
    %104 = arith.addf %103, %98 : vector<16x256xf32>
    %105 = tpu.concatenate %101, %104 in 0 : vector<16x256xf32>, vector<16x256xf32> -> vector<32x256xf32>
    %106 = arith.truncf %105 : vector<32x256xf32> to vector<32x256xbf16>
    %cst_84 = arith.constant dense<0.000000e+00> : vector<16x256xf32>
    %107 = tpu.matmul %4, %106, %cst_84 {dimension_numbers = #tpu.dot_dimension_numbers<[1], [0], [0], [1], [0, 0, 1, 1], [], []>} : vector<16x32xbf16>, vector<32x256xbf16>, vector<16x256xf32> -> vector<16x256xf32>
    %108 = vector.broadcast %26 : vector<16x1xf32> to vector<16x256xf32>
    %109 = arith.addf %107, %108 : vector<16x256xf32>
    %110 = arith.truncf %109 : vector<16x256xf32> to vector<16x256xbf16>
    %cst_85 = arith.constant dense<0.000000e+00> : vector<4x256xf32>
    %111 = tpu.matmul %10, %110, %cst_85 {dimension_numbers = #tpu.dot_dimension_numbers<[1], [0], [0], [1], [0, 0, 1, 1], [], []>} : vector<4x16xbf16>, vector<16x256xbf16>, vector<4x256xf32> -> vector<4x256xf32>
    %112 = vector.broadcast %40 : vector<4x1xf32> to vector<4x256xf32>
    %113 = arith.addf %111, %112 : vector<4x256xf32>
    %cst_86 = arith.constant 0.000000e+00 : f32
    %114 = vector.broadcast %cst_86 : f32 to vector<4x256xf32>
    %115 = arith.maximumf %113, %114 : vector<4x256xf32>
    %116 = arith.truncf %115 : vector<4x256xf32> to vector<4x256xbf16>
    %cst_87 = arith.constant dense<0.000000e+00> : vector<16x256xf32>
    %117 = tpu.matmul %18, %116, %cst_87 {dimension_numbers = #tpu.dot_dimension_numbers<[1], [0], [0], [1], [0, 0, 1, 1], [], []>} : vector<16x4xbf16>, vector<4x256xbf16>, vector<16x256xf32> -> vector<16x256xf32>
    %118 = vector.broadcast %32 : vector<16x1xf32> to vector<16x256xf32>
    %119 = arith.addf %117, %118 : vector<16x256xf32>
    %cst_88 = arith.constant dense<0.000000e+00> : vector<16xf32>
    %120 = vector.multi_reduction <add>, %109, %cst_88 [1] : vector<16x256xf32> to vector<16xf32>
    %121 = vector.shape_cast %120 : vector<16xf32> to vector<16x1xf32>
    %cst_89 = arith.constant 2.560000e+02 : f32
    %122 = vector.broadcast %cst_89 : f32 to vector<16x1xf32>
    %123 = arith.divf %121, %122 : vector<16x1xf32>
    %124 = vector.shape_cast %123 : vector<16x1xf32> to vector<16x1xf32>
    %125 = vector.broadcast %124 : vector<16x1xf32> to vector<16x128xf32>
    %126 = arith.truncf %125 : vector<16x128xf32> to vector<16x128xbf16>
    %cst_90 = arith.constant dense<0.000000e+00> : vector<4x128xf32>
    %127 = tpu.matmul %12, %126, %cst_90 {dimension_numbers = #tpu.dot_dimension_numbers<[1], [0], [0], [1], [0, 0, 1, 1], [], []>} : vector<4x16xbf16>, vector<16x128xbf16>, vector<4x128xf32> -> vector<4x128xf32>
    %128 = vector.broadcast %42 : vector<4x1xf32> to vector<4x128xf32>
    %129 = arith.addf %127, %128 : vector<4x128xf32>
    %cst_91 = arith.constant 0.000000e+00 : f32
    %130 = vector.broadcast %cst_91 : f32 to vector<4x128xf32>
    %131 = arith.maximumf %129, %130 : vector<4x128xf32>
    %132 = arith.truncf %131 : vector<4x128xf32> to vector<4x128xbf16>
    %cst_92 = arith.constant dense<0.000000e+00> : vector<16x128xf32>
    %133 = tpu.matmul %20, %132, %cst_92 {dimension_numbers = #tpu.dot_dimension_numbers<[1], [0], [0], [1], [0, 0, 1, 1], [], []>} : vector<16x4xbf16>, vector<4x128xbf16>, vector<16x128xf32> -> vector<16x128xf32>
    %134 = vector.broadcast %34 : vector<16x1xf32> to vector<16x128xf32>
    %135 = arith.addf %133, %134 : vector<16x128xf32>
    %136 = vector.extract_strided_slice %135 {offsets = [0, 0], sizes = [16, 1], strides = [1, 1]} : vector<16x128xf32> to vector<16x1xf32>
    %137 = vector.broadcast %136 : vector<16x1xf32> to vector<16x256xf32>
    %138 = arith.addf %119, %137 : vector<16x256xf32>
    %cst_93 = arith.constant 0.000000e+00 : f32
    %139 = vector.broadcast %cst_93 : f32 to vector<16x256xf32>
    %140 = arith.subf %139, %138 : vector<16x256xf32>
    %141 = math.exp %140 : vector<16x256xf32>
    %cst_94 = arith.constant 1.000000e+00 : f32
    %142 = vector.broadcast %cst_94 : f32 to vector<16x256xf32>
    %143 = arith.addf %142, %141 : vector<16x256xf32>
    %144 = tpu.reciprocal %143 {approx = true} : vector<16x256xf32> -> vector<16x256xf32>
    %c0_95 = arith.constant 0 : index
    %c0_96 = arith.constant 0 : index
    %c0_97 = arith.constant 0 : index
    %145 = vector.load %arg1[%c0_95, %c0_96, %c0_97] : memref<1x16x256xf32, #tpu.memory_space<vmem>>, vector<1x16x256xf32>
    %146 = vector.shape_cast %145 : vector<1x16x256xf32> to vector<16x256xf32>
    %147 = arith.mulf %146, %144 : vector<16x256xf32>
    %c0_98 = arith.constant 0 : index
    %c0_99 = arith.constant 0 : index
    %c0_100 = arith.constant 0 : index
    %148 = vector.load %arg9[%c0_98, %c0_99, %c0_100] : memref<1x16x256xf32, #tpu.memory_space<vmem>>, vector<1x16x256xf32>
    %149 = vector.shape_cast %148 : vector<1x16x256xf32> to vector<16x256xf32>
    %150 = vector.shape_cast %147 : vector<16x256xf32> to vector<1x16x256xf32>
    tpu.vector_store %arg9[%c0_98, %c0_99, %c0_100], %150 {strides = array<i32>} : memref<1x16x256xf32, #tpu.memory_space<vmem>>, vector<1x16x256xf32>,
    %c0_101 = arith.constant 0 : index
    %c0_102 = arith.constant 0 : index
    %c0_103 = arith.constant 0 : index
    %151 = vector.load %arg2[%c0_101, %c0_102, %c0_103] : memref<1x16x256xf32, #tpu.memory_space<vmem>>, vector<1x16x256xf32>
    %152 = vector.shape_cast %151 : vector<1x16x256xf32> to vector<16x256xf32>
    %cst_104 = arith.constant 1.000000e+00 : f32
    %153 = vector.broadcast %cst_104 : f32 to vector<16x256xf32>
    %154 = arith.subf %153, %144 : vector<16x256xf32>
    %155 = arith.mulf %152, %154 : vector<16x256xf32>
    %c0_105 = arith.constant 0 : index
    %c0_106 = arith.constant 0 : index
    %c0_107 = arith.constant 0 : index
    %156 = vector.load %arg10[%c0_105, %c0_106, %c0_107] : memref<1x16x256xf32, #tpu.memory_space<vmem>>, vector<1x16x256xf32>
    %157 = vector.shape_cast %156 : vector<1x16x256xf32> to vector<16x256xf32>
    %158 = vector.shape_cast %155 : vector<16x256xf32> to vector<1x16x256xf32>
    tpu.vector_store %arg10[%c0_105, %c0_106, %c0_107], %158 {strides = array<i32>} : memref<1x16x256xf32, #tpu.memory_space<vmem>>, vector<1x16x256xf32>,
    return
  }
  func.func @transform_0(%arg0: i32) -> (i32, i32, i32) {
    %c0_i32 = arith.constant 0 : i32
    %c0_i32_0 = arith.constant 0 : i32
    %c0_i32_1 = arith.constant 0 : i32
    return %arg0, %c0_i32, %c0_i32_0 : i32, i32, i32
  }
  func.func @transform_1(%arg0: i32) -> (i32, i32, i32) {
    %c0_i32 = arith.constant 0 : i32
    %c0_i32_0 = arith.constant 0 : i32
    %c0_i32_1 = arith.constant 0 : i32
    return %arg0, %c0_i32, %c0_i32_0 : i32, i32, i32
  }
  func.func @transform_2(%arg0: i32) -> (i32, i32, i32) {
    %c0_i32 = arith.constant 0 : i32
    %c0_i32_0 = arith.constant 0 : i32
    %c0_i32_1 = arith.constant 0 : i32
    %c0_i32_2 = arith.constant 0 : i32
    return %c0_i32, %c0_i32_0, %c0_i32_1 : i32, i32, i32
  }
  func.func @transform_3(%arg0: i32) -> (i32, i32) {
    %c0_i32 = arith.constant 0 : i32
    %c0_i32_0 = arith.constant 0 : i32
    %c0_i32_1 = arith.constant 0 : i32
    return %c0_i32, %c0_i32_0 : i32, i32
  }
  func.func @transform_4(%arg0: i32) -> (i32, i32, i32) {
    %c0_i32 = arith.constant 0 : i32
    %c0_i32_0 = arith.constant 0 : i32
    %c0_i32_1 = arith.constant 0 : i32
    %c0_i32_2 = arith.constant 0 : i32
    return %c0_i32, %c0_i32_0, %c0_i32_1 : i32, i32, i32
  }
  func.func @transform_5(%arg0: i32) -> (i32, i32, i32) {
    %c0_i32 = arith.constant 0 : i32
    %c0_i32_0 = arith.constant 0 : i32
    %c0_i32_1 = arith.constant 0 : i32
    %c0_i32_2 = arith.constant 0 : i32
    return %c0_i32, %c0_i32_0, %c0_i32_1 : i32, i32, i32
  }
  func.func @transform_6(%arg0: i32) -> (i32, i32, i32) {
    %c0_i32 = arith.constant 0 : i32
    %c0_i32_0 = arith.constant 0 : i32
    %c0_i32_1 = arith.constant 0 : i32
    %c0_i32_2 = arith.constant 0 : i32
    return %c0_i32, %c0_i32_0, %c0_i32_1 : i32, i32, i32
  }
  func.func @transform_7(%arg0: i32) -> (i32, i32, i32) {
    %c0_i32 = arith.constant 0 : i32
    %c0_i32_0 = arith.constant 0 : i32
    %c0_i32_1 = arith.constant 0 : i32
    %c0_i32_2 = arith.constant 0 : i32
    return %c0_i32, %c0_i32_0, %c0_i32_1 : i32, i32, i32
  }
  func.func @transform_8(%arg0: i32) -> (i32, i32, i32) {
    %c0_i32 = arith.constant 0 : i32
    %c0_i32_0 = arith.constant 0 : i32
    %c0_i32_1 = arith.constant 0 : i32
    return %arg0, %c0_i32, %c0_i32_0 : i32, i32, i32
  }
  func.func @transform_9(%arg0: i32) -> (i32, i32, i32) {
    %c0_i32 = arith.constant 0 : i32
    %c0_i32_0 = arith.constant 0 : i32
    %c0_i32_1 = arith.constant 0 : i32
    return %arg0, %c0_i32, %c0_i32_0 : i32, i32, i32
  }
}

</mosaic_0001>

<llo_original>
// kernel: cmdfb_forward.1
$region0: #{cmdfb_forward.1}
  #allocation0 [shape = 'u32[]', space=smem, size = 0x4, offset = 0x4, fixed_abs, tag = 'smem constant byte address 0x4 - core index']
  #allocation1 [shape = 'u32[144,128]{1,0:T(1,128)}', space=vmem, size = 0x12000, scoped, tag = 'internal scratch']
  %s0 = inlined_call_operand.vmem [shape: f32[2,16,256], index: 0, kind: input, shape index: {}]
  %s1 = inlined_call_operand.vmem [shape: f32[2,16,256], index: 1, kind: input, shape index: {}]
  %s2 = inlined_call_operand.vmem [shape: bf16[2,16,16], index: 2, kind: input, shape index: {}]
  %s3 = inlined_call_operand.vmem [shape: bf16[16,32], index: 3, kind: input, shape index: {}]
  %s4 = inlined_call_operand.vmem [shape: bf16[4,4,16], index: 4, kind: input, shape index: {}]
  %s5 = inlined_call_operand.vmem [shape: bf16[4,16,4], index: 5, kind: input, shape index: {}]
  %s6 = inlined_call_operand.vmem [shape: f32[7,16,1], index: 6, kind: input, shape index: {}]
  %s7 = inlined_call_operand.vmem [shape: f32[4,4,1], index: 7, kind: input, shape index: {}]
  %s8 = inlined_call_operand.vmem [shape: f32[2,16,256], index: 8, kind: output, shape index: {0}]
  %s9 = inlined_call_operand.vmem [shape: f32[2,16,256], index: 9, kind: output, shape index: {1}]
  %10 = xla_tuple %s8, %s9
  %s11 = sld [smem:[#allocation0]]
  $region73: #{cmdfb_forward.1} parent=0
    _
  %s13 = ssub.s32 1, %s11
  %s14 = scalar_select 0, %s13, %s11
  loop: start=0, step=1, limit=4
  $region2: #{cmdfb_forward.1} parent=0 // loop_pre_header
    _
  $region3: #{cmdfb_forward.1} parent=0 // loop_header
    %s16 = sphi 0, %s20
    %p17 = scmp.ge.s32.totalorder %s16, 4
    %s26 = sphi 0, %s28
    %s29 = sphi 0, %s26
    %s30 = sphi 0, %s29
    %s46 = sphi 0, %s30
    %s52 = sphi 0, %s54
    %s55 = sphi 0, %s52
    %s56 = sphi 0, %s55
    %s72 = sphi 0, %s56
    %s76 = sphi 0, %s76
    %s78 = sphi 0, %s76
    %s79 = sphi 0, %s78
    %s93 = sphi 0, %s79
    %s97 = sphi 0, %s97
    %s99 = sphi 0, %s97
    %s100 = sphi 0, %s99
    %s114 = sphi 0, %s100
    %s118 = sphi 0, %s118
    %s120 = sphi 0, %s118
    %s121 = sphi 0, %s120
    %s135 = sphi 0, %s121
    %s139 = sphi 0, %s139
    %s141 = sphi 0, %s139
    %s142 = sphi 0, %s141
    %s156 = sphi 0, %s142
    %s160 = sphi 0, %s160
    %s162 = sphi 0, %s160
    %s163 = sphi 0, %s162
    %s177 = sphi 0, %s163
    %s181 = sphi 0, %s181
    %s183 = sphi 0, %s181
    %s184 = sphi 0, %s183
    %s198 = sphi 0, %s184
    %s204 = sphi 0, %s206
    %s207 = sphi 0, %s204
    %s208 = sphi 0, %s207
    %s224 = sphi 0, %s208
    %s230 = sphi 0, %s232
    %s233 = sphi 0, %s230
    %s234 = sphi 0, %s233
    %s250 = sphi 0, %s234
  $region4: #{cmdfb_forward.1} parent=0 // loop_header_branch
    %19 = sbr.rel (%p17) target = $region8
  $region5: #{cmdfb_forward.1} parent=0 // loop_body
    %s21 = ssub.s32 %s16, 1
    %s22 = ssub.s32 %s16, 2
    %s23 = sadd.s32 %s16, 1
    %s24 = ssub.s32 %s16, %s23
    %p25 = scmp.eq.s32.totalorder %s24, 0
    %s27 = sadd.s32 %s26, 1
    %s28 = scalar_select %p25, %s26, %s27
    %p31 = pneg %p25
    %p32 = scmp.eq.s32.totalorder %s16, 1
    %p33 = por %p31, %p32
    %p34 = scmp.ne.s32.totalorder %s26, %s29
    %p35 = scmp.eq.s32.totalorder %s16, 0
    %p36 = por %p34, %p35
    %p37 = scmp.ne.s32.totalorder %s26, %s29
    %p38 = scmp.eq.s32.totalorder %s21, 1
    %p39 = por %p37, %p38
    %p40 = scmp.ne.s32.totalorder %s29, %s30
    %p41 = scmp.eq.s32.totalorder %s21, 0
    %p42 = por %p40, %p41
    %p43 = scmp.ne.s32.totalorder %s29, %s30
    %p44 = scmp.eq.s32.totalorder %s22, 1
    %p45 = por %p43, %p44
    %p47 = scmp.ne.s32.totalorder %s30, %s46
    %p48 = scmp.eq.s32.totalorder %s22, 0
    %p49 = por %p47, %p48
    %s50 = ssub.s32 %s16, %s23
    %p51 = scmp.eq.s32.totalorder %s50, 0
    %s53 = sadd.s32 %s52, 1
    %s54 = scalar_select %p51, %s52, %s53
    %p57 = pneg %p51
    %p58 = scmp.eq.s32.totalorder %s16, 1
    %p59 = por %p57, %p58
    %p60 = scmp.ne.s32.totalorder %s52, %s55
    %p61 = scmp.eq.s32.totalorder %s16, 0
    %p62 = por %p60, %p61
    %p63 = scmp.ne.s32.totalorder %s52, %s55
    %p64 = scmp.eq.s32.totalorder %s21, 1
    %p65 = por %p63, %p64
    %p66 = scmp.ne.s32.totalorder %s55, %s56
    %p67 = scmp.eq.s32.totalorder %s21, 0
    %p68 = por %p66, %p67
    %p69 = scmp.ne.s32.totalorder %s55, %s56
    %p70 = scmp.eq.s32.totalorder %s22, 1
    %p71 = por %p69, %p70
    %p73 = scmp.ne.s32.totalorder %s56, %s72
    %p74 = scmp.eq.s32.totalorder %s22, 0
    %p75 = por %p73, %p74
    %s77 = sadd.s32 %s76, 1
    %p80 = scmp.eq.s32.totalorder %s16, 1
    %p81 = scmp.ne.s32.totalorder %s76, %s78
    %p82 = scmp.eq.s32.totalorder %s16, 0
    %p83 = por %p81, %p82
    %p84 = scmp.ne.s32.totalorder %s76, %s78
    %p85 = scmp.eq.s32.totalorder %s21, 1
    %p86 = por %p84, %p85
    %p87 = scmp.ne.s32.totalorder %s78, %s79
    %p88 = scmp.eq.s32.totalorder %s21, 0
    %p89 = por %p87, %p88
    %p90 = scmp.ne.s32.totalorder %s78, %s79
    %p91 = scmp.eq.s32.totalorder %s22, 1
    %p92 = por %p90, %p91
    %p94 = scmp.ne.s32.totalorder %s79, %s93
    %p95 = scmp.eq.s32.totalorder %s22, 0
    %p96 = por %p94, %p95
    %s98 = sadd.s32 %s97, 1
    %p101 = scmp.eq.s32.totalorder %s16, 1
    %p102 = scmp.ne.s32.totalorder %s97, %s99
    %p103 = scmp.eq.s32.totalorder %s16, 0
    %p104 = por %p102, %p103
    %p105 = scmp.ne.s32.totalorder %s97, %s99
    %p106 = scmp.eq.s32.totalorder %s21, 1
    %p107 = por %p105, %p106
    %p108 = scmp.ne.s32.totalorder %s99, %s100
    %p109 = scmp.eq.s32.totalorder %s21, 0
    %p110 = por %p108, %p109
    %p111 = scmp.ne.s32.totalorder %s99, %s100
    %p112 = scmp.eq.s32.totalorder %s22, 1
    %p113 = por %p111, %p112
    %p115 = scmp.ne.s32.totalorder %s100, %s114
    %p116 = scmp.eq.s32.totalorder %s22, 0
    %p117 = por %p115, %p116
    %s119 = sadd.s32 %s118, 1
    %p122 = scmp.eq.s32.totalorder %s16, 1
    %p123 = scmp.ne.s32.totalorder %s118, %s120
    %p124 = scmp.eq.s32.totalorder %s16, 0
    %p125 = por %p123, %p124
    %p126 = scmp.ne.s32.totalorder %s118, %s120
    %p127 = scmp.eq.s32.totalorder %s21, 1
    %p128 = por %p126, %p127
    %p129 = scmp.ne.s32.totalorder %s120, %s121
    %p130 = scmp.eq.s32.totalorder %s21, 0
    %p131 = por %p129, %p130
    %p132 = scmp.ne.s32.totalorder %s120, %s121
    %p133 = scmp.eq.s32.totalorder %s22, 1
    %p134 = por %p132, %p133
    %p136 = scmp.ne.s32.totalorder %s121, %s135
    %p137 = scmp.eq.s32.totalorder %s22, 0
    %p138 = por %p136, %p137
    %s140 = sadd.s32 %s139, 1
    %p143 = scmp.eq.s32.totalorder %s16, 1
    %p144 = scmp.ne.s32.totalorder %s139, %s141
    %p145 = scmp.eq.s32.totalorder %s16, 0
    %p146 = por %p144, %p145
    %p147 = scmp.ne.s32.totalorder %s139, %s141
    %p148 = scmp.eq.s32.totalorder %s21, 1
    %p149 = por %p147, %p148
    %p150 = scmp.ne.s32.totalorder %s141, %s142
    %p151 = scmp.eq.s32.totalorder %s21, 0
    %p152 = por %p150, %p151
    %p153 = scmp.ne.s32.totalorder %s141, %s142
    %p154 = scmp.eq.s32.totalorder %s22, 1
    %p155 = por %p153, %p154
    %p157 = scmp.ne.s32.totalorder %s142, %s156
    %p158 = scmp.eq.s32.totalorder %s22, 0
    %p159 = por %p157, %p158
    %s161 = sadd.s32 %s160, 1
    %p164 = scmp.eq.s32.totalorder %s16, 1
    %p165 = scmp.ne.s32.totalorder %s160, %s162
    %p166 = scmp.eq.s32.totalorder %s16, 0
    %p167 = por %p165, %p166
    %p168 = scmp.ne.s32.totalorder %s160, %s162
    %p169 = scmp.eq.s32.totalorder %s21, 1
    %p170 = por %p168, %p169
    %p171 = scmp.ne.s32.totalorder %s162, %s163
    %p172 = scmp.eq.s32.totalorder %s21, 0
    %p173 = por %p171, %p172
    %p174 = scmp.ne.s32.totalorder %s162, %s163
    %p175 = scmp.eq.s32.totalorder %s22, 1
    %p176 = por %p174, %p175
    %p178 = scmp.ne.s32.totalorder %s163, %s177
    %p179 = scmp.eq.s32.totalorder %s22, 0
    %p180 = por %p178, %p179
    %s182 = sadd.s32 %s181, 1
    %p185 = scmp.eq.s32.totalorder %s16, 1
    %p186 = scmp.ne.s32.totalorder %s181, %s183
    %p187 = scmp.eq.s32.totalorder %s16, 0
    %p188 = por %p186, %p187
    %p189 = scmp.ne.s32.totalorder %s181, %s183
    %p190 = scmp.eq.s32.totalorder %s21, 1
    %p191 = por %p189, %p190
    %p192 = scmp.ne.s32.totalorder %s183, %s184
    %p193 = scmp.eq.s32.totalorder %s21, 0
    %p194 = por %p192, %p193
    %p195 = scmp.ne.s32.totalorder %s183, %s184
    %p196 = scmp.eq.s32.totalorder %s22, 1
    %p197 = por %p195, %p196
    %p199 = scmp.ne.s32.totalorder %s184, %s198
    %p200 = scmp.eq.s32.totalorder %s22, 0
    %p201 = por %p199, %p200
    %s202 = ssub.s32 %s16, %s23
    %p203 = scmp.eq.s32.totalorder %s202, 0
    %s205 = sadd.s32 %s204, 1
    %s206 = scalar_select %p203, %s204, %s205
    %p209 = pneg %p203
    %p210 = scmp.eq.s32.totalorder %s16, 1
    %p211 = por %p209, %p210
    %p212 = scmp.ne.s32.totalorder %s204, %s207
    %p213 = scmp.eq.s32.totalorder %s16, 0
    %p214 = por %p212, %p213
    %p215 = scmp.ne.s32.totalorder %s204, %s207
    %p216 = scmp.eq.s32.totalorder %s21, 1
    %p217 = por %p215, %p216
    %p218 = scmp.ne.s32.totalorder %s207, %s208
    %p219 = scmp.eq.s32.totalorder %s21, 0
    %p220 = por %p218, %p219
    %p221 = scmp.ne.s32.totalorder %s207, %s208
    %p222 = scmp.eq.s32.totalorder %s22, 1
    %p223 = por %p221, %p222
    %p225 = scmp.ne.s32.totalorder %s208, %s224
    %p226 = scmp.eq.s32.totalorder %s22, 0
    %p227 = por %p225, %p226
    %s228 = ssub.s32 %s16, %s23
    %p229 = scmp.eq.s32.totalorder %s228, 0
    %s231 = sadd.s32 %s230, 1
    %s232 = scalar_select %p229, %s230, %s231
    %p235 = pneg %p229
    %p236 = scmp.eq.s32.totalorder %s16, 1
    %p237 = por %p235, %p236
    %p238 = scmp.ne.s32.totalorder %s230, %s233
    %p239 = scmp.eq.s32.totalorder %s16, 0
    %p240 = por %p238, %p239
    %p241 = scmp.ne.s32.totalorder %s230, %s233
    %p242 = scmp.eq.s32.totalorder %s21, 1
    %p243 = por %p241, %p242
    %p244 = scmp.ne.s32.totalorder %s233, %s234
    %p245 = scmp.eq.s32.totalorder %s21, 0
    %p246 = por %p244, %p245
    %p247 = scmp.ne.s32.totalorder %s233, %s234
    %p248 = scmp.eq.s32.totalorder %s22, 1
    %p249 = por %p247, %p248
    %p251 = scmp.ne.s32.totalorder %s234, %s250
    %p252 = scmp.eq.s32.totalorder %s22, 0
    %p253 = por %p251, %p252
    %p254 = scmp.le.s32.totalorder 1, %s16
    %p255 = scmp.lt.s32.totalorder %s16, 3
    %p256 = pnand %p254, %p255
    %p257 = pneg %p256
    // Predicated region
    $region9: #{cmdfb_forward.1} parent=5 // pred_check
      _
    $region10: #{cmdfb_forward.1} parent=5 // pred_check_branch
      %259 = sbr.rel (%p256) target = $region12
    $region11: #{cmdfb_forward.1} parent=5 // pred_region
      %s260 = ssub.s32 %s16, 1
      // Predicated region
      $region13: #{cmdfb_forward.1} parent=11 // pred_check
        %p261 = pneg %p89
      $region14: #{cmdfb_forward.1} parent=11 // pred_check_branch
        %263 = sbr.rel (%p261) target = $region16
      $region15: #{cmdfb_forward.1} parent=11 // pred_region
        _
      $region16: #{cmdfb_forward.1} parent=11 // pred_fallthru
        _
      // Predicated region
      $region17: #{cmdfb_forward.1} parent=11 // pred_check
        %p264 = pneg %p110
      $region18: #{cmdfb_forward.1} parent=11 // pred_check_branch
        %266 = sbr.rel (%p264) target = $region20
      $region19: #{cmdfb_forward.1} parent=11 // pred_region
        _
      $region20: #{cmdfb_forward.1} parent=11 // pred_fallthru
        _
      // Predicated region
      $region21: #{cmdfb_forward.1} parent=11 // pred_check
        %p267 = pneg %p131
      $region22: #{cmdfb_forward.1} parent=11 // pred_check_branch
        %269 = sbr.rel (%p267) target = $region24
      $region23: #{cmdfb_forward.1} parent=11 // pred_region
        _
      $region24: #{cmdfb_forward.1} parent=11 // pred_fallthru
        _
      // Predicated region
      $region25: #{cmdfb_forward.1} parent=11 // pred_check
        %p270 = pneg %p152
      $region26: #{cmdfb_forward.1} parent=11 // pred_check_branch
        %272 = sbr.rel (%p270) target = $region28
      $region27: #{cmdfb_forward.1} parent=11 // pred_region
        _
      $region28: #{cmdfb_forward.1} parent=11 // pred_fallthru
        _
      // Predicated region
      $region29: #{cmdfb_forward.1} parent=11 // pred_check
        %p273 = pneg %p173
      $region30: #{cmdfb_forward.1} parent=11 // pred_check_branch
        %275 = sbr.rel (%p273) target = $region32
      $region31: #{cmdfb_forward.1} parent=11 // pred_region
        _
      $region32: #{cmdfb_forward.1} parent=11 // pred_fallthru
        _
      // Predicated region
      $region33: #{cmdfb_forward.1} parent=11 // pred_check
        %p276 = pneg %p194
      $region34: #{cmdfb_forward.1} parent=11 // pred_check_branch
        %278 = sbr.rel (%p276) target = $region36
      $region35: #{cmdfb_forward.1} parent=11 // pred_region
        _
      $region36: #{cmdfb_forward.1} parent=11 // pred_fallthru
        _
    $region12: #{cmdfb_forward.1} parent=5 // pred_fallthru
      _
    %p279 = scmp.lt.s32.totalorder %s16, 2
    // Predicated region
    $region37: #{cmdfb_forward.1} parent=5 // pred_check
      %p280 = pneg %p279
    $region38: #{cmdfb_forward.1} parent=5 // pred_check_branch
      %282 = sbr.rel (%p280) target = $region40
    $region39: #{cmdfb_forward.1} parent=5 // pred_region
      // Predicated region
      $region41: #{cmdfb_forward.1} parent=39 // pred_check
        %p283 = pneg %p36
      $region42: #{cmdfb_forward.1} parent=39 // pred_check_branch
        %285 = sbr.rel (%p283) target = $region44
      $region43: #{cmdfb_forward.1} parent=39 // pred_region
        %p286 = scmp.lt.s32.totalorder %s16, 1
        %s287 = scalar_select %p286, %s16, 1
        %s288 = smul.addr %s287, 4
        %s289 = smul.addr %s288, 8
        %s290 = scalar_lea.vmem %s0, %s289
      $region44: #{cmdfb_forward.1} parent=39 // pred_fallthru
        _
      // Predicated region
      $region45: #{cmdfb_forward.1} parent=39 // pred_check
        %p291 = pneg %p62
      $region46: #{cmdfb_forward.1} parent=39 // pred_check_branch
        %293 = sbr.rel (%p291) target = $region48
      $region47: #{cmdfb_forward.1} parent=39 // pred_region
        %p294 = scmp.lt.s32.totalorder %s16, 1
        %s295 = scalar_select %p294, %s16, 1
        %s296 = smul.addr %s295, 4
        %s297 = smul.addr %s296, 8
        %s298 = scalar_lea.vmem %s1, %s297
      $region48: #{cmdfb_forward.1} parent=39 // pred_fallthru
        _
    $region40: #{cmdfb_forward.1} parent=5 // pred_fallthru
      _
    %p299 = scmp.le.s32.totalorder 1, %s16
    %p300 = scmp.lt.s32.totalorder %s16, 3
    %p301 = pnand %p299, %p300
    %p302 = pneg %p301
    // Predicated region
    $region49: #{cmdfb_forward.1} parent=5 // pred_check
      _
    $region50: #{cmdfb_forward.1} parent=5 // pred_check_branch
      %304 = sbr.rel (%p301) target = $region52
    $region51: #{cmdfb_forward.1} parent=5 // pred_region
      %s305 = ssub.s32 %s16, 1
      %p306 = scmp.lt.s32.totalorder %s21, 1
      %s307 = scalar_select %p306, %s21, 1
      %s308 = smul.addr %s307, 4
      %s309 = smul.addr %s308, 8
      %s310 = scalar_lea.vmem %s0, %s309
      %p311 = pneg %p42
      %p312 = pneg %p39
      %p313 = scmp.lt.s32.totalorder %s21, 1
      %s314 = scalar_select %p313, %s21, 1
      %s315 = smul.addr %s314, 4
      %s316 = smul.addr %s315, 8
      %s317 = scalar_lea.vmem %s1, %s316
      %p318 = pneg %p68
      %p319 = pneg %p65
      %p320 = pneg %p89
      %p321 = pneg %p86
      %p322 = pneg %p110
      %p323 = pneg %p107
      %p324 = pneg %p131
      %p325 = pneg %p128
      %p326 = pneg %p152
      %p327 = pneg %p149
      %p328 = pneg %p173
      %p329 = pneg %p170
      %p330 = pneg %p194
      %p331 = pneg %p191
      %p332 = pneg %p220
      %p333 = pneg %p217
      %p334 = scmp.lt.s32.totalorder %s21, 1
      %s335 = scalar_select %p334, %s21, 1
      %s336 = smul.addr %s335, 4
      %s337 = smul.addr %s336, 8
      %s338 = scalar_lea.vmem %s8, %s337
      %p339 = pneg %p246
      %p340 = pneg %p243
      %p341 = scmp.lt.s32.totalorder %s21, 1
      %s342 = scalar_select %p341, %s21, 1
      %s343 = smul.addr %s342, 4
      %s344 = smul.addr %s343, 8
      %s345 = scalar_lea.vmem %s9, %s344
      %p346 = scmp.lt.s32.totalorder %s21, 1
      %s347 = scalar_select %p346, %s21, 1
      %s348 = smul.addr %s347, 4
      %s349 = smul.addr %s348, 8
      %s350 = scalar_lea.vmem %s0, %s349
      %p351 = scmp.lt.s32.totalorder %s21, 1
      %s352 = scalar_select %p351, %s21, 1
      %s353 = smul.addr %s352, 4
      %s354 = smul.addr %s353, 8
      %s355 = scalar_lea.vmem %s1, %s354
      %p356 = scmp.lt.s32.totalorder %s21, 1
      %s357 = scalar_select %p356, %s21, 1
      %s358 = smul.addr %s357, 4
      %s359 = smul.addr %s358, 8
      %s360 = scalar_lea.vmem %s8, %s359
      %p361 = scmp.lt.s32.totalorder %s21, 1
      %s362 = scalar_select %p361, %s21, 1
      %s363 = smul.addr %s362, 4
      %s364 = smul.addr %s363, 8
      %s365 = scalar_lea.vmem %s9, %s364
      %v367 = vld [vmem:[%s2] sm:$0xf]
      %v368 = vld [vmem:[%s2 + $0x4] sm:$0xf]
      %s369 = scalar_lea.vmem %s2, 8
      %v370 = vld [vmem:[%s369] sm:$0xf]
      %v371 = vld [vmem:[%s369 + $0x4] sm:$0xf]
      %v372 = vld [vmem:[%s3] sm:$0xf]
      %v373 = vld [vmem:[%s3 + $0x4] sm:$0xf]
      %v374 = vld [vmem:[%s4] sm:$0x3]
      %s375 = scalar_lea.vmem %s4, 2
      %v376 = vld [vmem:[%s375] sm:$0x3]
      %s377 = scalar_lea.vmem %s4, 4
      %v378 = vld [vmem:[%s377] sm:$0x3]
      %s379 = scalar_lea.vmem %s4, 6
      %v380 = vld [vmem:[%s379] sm:$0x3]
      %v381 = vld [vmem:[%s5] sm:$0xf]
      %v382 = vld [vmem:[%s5 + $0x4] sm:$0xf]
      %s383 = scalar_lea.vmem %s5, 8
      %v384 = vld [vmem:[%s383] sm:$0xf]
      %v385 = vld [vmem:[%s383 + $0x4] sm:$0xf]
      %s386 = scalar_lea.vmem %s5, 16
      %v387 = vld [vmem:[%s386] sm:$0xf]
      %v388 = vld [vmem:[%s386 + $0x4] sm:$0xf]
      %s389 = scalar_lea.vmem %s5, 24
      %v390 = vld [vmem:[%s389] sm:$0xf]
      %v391 = vld [vmem:[%s389 + $0x4] sm:$0xf]
      %v392 = vld [vmem:[%s6] sm:$0xff]
      %v393 = vld [vmem:[%s6 + $0x8] sm:$0xff]
      %s394 = scalar_lea.vmem %s6, 16
      %v395 = vld [vmem:[%s394] sm:$0xff]
      %v396 = vld [vmem:[%s394 + $0x8] sm:$0xff]
      %s397 = scalar_lea.vmem %s6, 32
      %v398 = vld [vmem:[%s397] sm:$0xff]
      %v399 = vld [vmem:[%s397 + $0x8] sm:$0xff]
      %s400 = scalar_lea.vmem %s6, 48
      %v401 = vld [vmem:[%s400] sm:$0xff]
      %v402 = vld [vmem:[%s400 + $0x8] sm:$0xff]
      %s403 = scalar_lea.vmem %s6, 64
      %v404 = vld [vmem:[%s403] sm:$0xff]
      %v405 = vld [vmem:[%s403 + $0x8] sm:$0xff]
      %s406 = scalar_lea.vmem %s6, 80
      %v407 = vld [vmem:[%s406] sm:$0xff]
      %v408 = vld [vmem:[%s406 + $0x8] sm:$0xff]
      %s409 = scalar_lea.vmem %s6, 96
      %v410 = vld [vmem:[%s409] sm:$0xff]
      %v411 = vld [vmem:[%s409 + $0x8] sm:$0xff]
      %v412 = vld [vmem:[%s7] sm:$0xf]
      %s413 = scalar_lea.vmem %s7, 4
      %v414 = vld [vmem:[%s413] sm:$0xf]
      %s415 = scalar_lea.vmem %s7, 8
      %v416 = vld [vmem:[%s415] sm:$0xf]
      %s417 = scalar_lea.vmem %s7, 12
      %v418 = vld [vmem:[%s417] sm:$0xf]
      %v419 = vld [vmem:[%s350] sm:$0xff]
      %v420 = vld [vmem:[%s350 + $0x8] sm:$0xff]
      %v421 = vld [vmem:[%s350 + $0x10] sm:$0xff]
      %v422 = vld [vmem:[%s350 + $0x18] sm:$0xff]
      %v423 = vld [vmem:[%s355] sm:$0xff]
      %v424 = vld [vmem:[%s355 + $0x8] sm:$0xff]
      %v425 = vld [vmem:[%s355 + $0x10] sm:$0xff]
      %v426 = vld [vmem:[%s355 + $0x18] sm:$0xff]
      %v427 = vadd.f32 %v419, %v423
      %v428 = vadd.f32 %v420, %v424
      %v429 = vadd.f32 %v421, %v425
      %v430 = vadd.f32 %v422, %v426
      %v431 = vpack.c.bf16 %v429, %v427
      %v432 = vpack.c.bf16 %v430, %v428
      %434 = vset.pattern.permute.xlu0 0
      %435 = vperm.xlu0 %434, %v392
      %v436 = vpop.permute.xlu0 %435
      %439 = vset.pattern.permute.xlu0 0
      %440 = vperm.xlu0 %439, %v393
      %v441 = vpop.permute.xlu0 %440
      %v445 = vunpack.c.l.b16 %v367
      %v446 = vunpack.c.l.b16 %v368
      %v447 = vpack.c.b16 %v446, %v445
      %vm448 = vcmask 130048
      %v450 = vsel %vm448, %v447, 0
      %452 = vmatprep.subr.bf16.mxu0 %v432
      %453 = vmatpush1.bf16.msra.mxu0 %v431
      %454 = vmatprep.subr.bf16.mxu0 0
      %455 = vmatpush1.bf16.msra.mxu0 0
      %456 = vmatprep.subr.bf16.mxu0 0
      %457 = vmatpush1.bf16.msra.mxu0 0
      %458 = vmatprep.subr.bf16.mxu0 0
      %459 = vmatpush1.bf16.msra.mxu0 0
      %460 = vmatprep.subr.bf16.mxu0 0
      %461 = vmatpush1.bf16.msra.mxu0 0
      %462 = vmatprep.subr.bf16.mxu0 0
      %463 = vmatpush1.bf16.msra.mxu0 0
      %464 = vmatprep.subr.bf16.mxu0 0
      %465 = vmatpush1.bf16.msra.mxu0 0
      %466 = vmatprep.subr.bf16.mxu0 0
      %467 = vmatpush1.bf16.msra.mxu0 0
      %468 = vmatprep.subr.bf16.mxu0 0
      %469 = vmatpush1.bf16.msra.mxu0 0
      %470 = vmatprep.subr.bf16.mxu0 0
      %471 = vmatpush1.bf16.msra.mxu0 0
      %472 = vmatprep.subr.bf16.mxu0 0
      %473 = vmatpush1.bf16.msra.mxu0 0
      %474 = vmatprep.subr.bf16.mxu0 0
      %475 = vmatpush1.bf16.msra.mxu0 0
      %476 = vmatprep.subr.bf16.mxu0 0
      %477 = vmatpush1.bf16.msra.mxu0 0
      %478 = vmatprep.subr.bf16.mxu0 0
      %479 = vmatpush1.bf16.msra.mxu0 0
      %480 = vmatprep.subr.bf16.mxu0 0
      %481 = vmatpush1.bf16.msra.mxu0 0
      %482 = vmatprep.subr.bf16.mxu0 0
      %483 = vmatpush1.bf16.msra.mxu0 0
      %484 = vmatprep.mubr.bf16.mxu0 0
      %485 = vmatmul.mubr.bf16.gmra.mrb[0].mxu0 %v450
      %v486 = vpop.f32.mrb[0].mxu0
      %v487 = vadd.f32 %v436, %v486
      %v488 = vpop.f32.mrb[0].mxu0
      %v489 = vadd.f32 %v436, %v488
      %v490 = vpop.f32.mrb[0].mxu0
      %v491 = vadd.f32 %v441, %v490
      %v492 = vpop.f32.mrb[0].mxu0
      %v493 = vadd.f32 %v441, %v492
      %494 = vdwg.mxu0
      %v495 = vmax.f32 %v487, 0.0
      %v496 = vmax.f32 %v489, 0.0
      %v497 = vmax.f32 %v491, 0.0
      %v498 = vmax.f32 %v493, 0.0
      %v499 = vpack.c.bf16 %v497, %v495
      %v500 = vpack.c.bf16 %v498, %v496
      %502 = vset.pattern.permute.xlu0 0
      %503 = vperm.xlu0 %502, %v395
      %v504 = vpop.permute.xlu0 %503
      %507 = vset.pattern.permute.xlu0 0
      %508 = vperm.xlu0 %507, %v396
      %v509 = vpop.permute.xlu0 %508
      %v513 = vunpack.c.l.b16 %v370
      %v514 = vunpack.c.l.b16 %v371
      %v515 = vpack.c.b16 %v514, %v513
      %v517 = vsel %vm448, %v515, 0
      %519 = vmatprep.subr.bf16.mxu0 %v500
      %520 = vmatpush1.bf16.msra.mxu0 %v499
      %521 = vmatprep.subr.bf16.mxu0 0
      %522 = vmatpush1.bf16.msra.mxu0 0
      %523 = vmatprep.subr.bf16.mxu0 0
      %524 = vmatpush1.bf16.msra.mxu0 0
      %525 = vmatprep.subr.bf16.mxu0 0
      %526 = vmatpush1.bf16.msra.mxu0 0
      %527 = vmatprep.subr.bf16.mxu0 0
      %528 = vmatpush1.bf16.msra.mxu0 0
      %529 = vmatprep.subr.bf16.mxu0 0
      %530 = vmatpush1.bf16.msra.mxu0 0
      %531 = vmatprep.subr.bf16.mxu0 0
      %532 = vmatpush1.bf16.msra.mxu0 0
      %533 = vmatprep.subr.bf16.mxu0 0
      %534 = vmatpush1.bf16.msra.mxu0 0
      %535 = vmatprep.subr.bf16.mxu0 0
      %536 = vmatpush1.bf16.msra.mxu0 0
      %537 = vmatprep.subr.bf16.mxu0 0
      %538 = vmatpush1.bf16.msra.mxu0 0
      %539 = vmatprep.subr.bf16.mxu0 0
      %540 = vmatpush1.bf16.msra.mxu0 0
      %541 = vmatprep.subr.bf16.mxu0 0
      %542 = vmatpush1.bf16.msra.mxu0 0
      %543 = vmatprep.subr.bf16.mxu0 0
      %544 = vmatpush1.bf16.msra.mxu0 0
      %545 = vmatprep.subr.bf16.mxu0 0
      %546 = vmatpush1.bf16.msra.mxu0 0
      %547 = vmatprep.subr.bf16.mxu0 0
      %548 = vmatpush1.bf16.msra.mxu0 0
      %549 = vmatprep.subr.bf16.mxu0 0
      %550 = vmatpush1.bf16.msra.mxu0 0
      %551 = vmatprep.mubr.bf16.mxu0 0
      %552 = vmatmul.mubr.bf16.gmra.mrb[0].mxu0 %v517
      %v553 = vpop.f32.mrb[0].mxu0
      %v554 = vadd.f32 %v504, %v553
      %v555 = vpop.f32.mrb[0].mxu0
      %v556 = vadd.f32 %v504, %v555
      %v557 = vpop.f32.mrb[0].mxu0
      %v558 = vadd.f32 %v509, %v557
      %v559 = vpop.f32.mrb[0].mxu0
      %v560 = vadd.f32 %v509, %v559
      %561 = vdwg.mxu0
      %v562 = vpack.c.bf16 %v558, %v554
      %v563 = vpack.c.bf16 %v560, %v556
      %565 = vset.pattern.permute.xlu0 0
      %566 = vperm.xlu0 %565, %v412
      %v567 = vpop.permute.xlu0 %566
      %v570 = vsel %vm448, %v374, 0
      %572 = vmatprep.subr.bf16.mxu0 %v563
      %573 = vmatpush1.bf16.msra.mxu0 %v562
      %574 = vmatprep.subr.bf16.mxu0 0
      %575 = vmatpush1.bf16.msra.mxu0 0
      %576 = vmatprep.subr.bf16.mxu0 0
      %577 = vmatpush1.bf16.msra.mxu0 0
      %578 = vmatprep.subr.bf16.mxu0 0
      %579 = vmatpush1.bf16.msra.mxu0 0
      %580 = vmatprep.subr.bf16.mxu0 0
      %581 = vmatpush1.bf16.msra.mxu0 0
      %582 = vmatprep.subr.bf16.mxu0 0
      %583 = vmatpush1.bf16.msra.mxu0 0
      %584 = vmatprep.subr.bf16.mxu0 0
      %585 = vmatpush1.bf16.msra.mxu0 0
      %586 = vmatprep.subr.bf16.mxu0 0
      %587 = vmatpush1.bf16.msra.mxu0 0
      %588 = vmatprep.subr.bf16.mxu0 0
      %589 = vmatpush1.bf16.msra.mxu0 0
      %590 = vmatprep.subr.bf16.mxu0 0
      %591 = vmatpush1.bf16.msra.mxu0 0
      %592 = vmatprep.subr.bf16.mxu0 0
      %593 = vmatpush1.bf16.msra.mxu0 0
      %594 = vmatprep.subr.bf16.mxu0 0
      %595 = vmatpush1.bf16.msra.mxu0 0
      %596 = vmatprep.subr.bf16.mxu0 0
      %597 = vmatpush1.bf16.msra.mxu0 0
      %598 = vmatprep.subr.bf16.mxu0 0
      %599 = vmatpush1.bf16.msra.mxu0 0
      %600 = vmatprep.subr.bf16.mxu0 0
      %601 = vmatpush1.bf16.msra.mxu0 0
      %602 = vmatprep.subr.bf16.mxu0 0
      %603 = vmatpush1.bf16.msra.mxu0 0
      %604 = vmatprep.mubr.bf16.mxu0 0
      %605 = vmatmul.mubr.bf16.gmra.mrb[0].mxu0 %v570
      %v606 = vpop.f32.mrb[0].mxu0
      %v607 = vadd.f32 %v567, %v606
      %v608 = vpop.f32.mrb[0].mxu0
      %v609 = vadd.f32 %v567, %v608
      %v610 = vpop.f32.mrb[0].mxu0
      %v611 = vpop.f32.mrb[0].mxu0
      %612 = vdwg.mxu0
      %v613 = vmax.f32 %v607, 0.0
      %v614 = vmax.f32 %v609, 0.0
      %v615 = vpack.c.bf16 %v613, %v613
      %v616 = vpack.c.bf16 %v614, %v614
      %618 = vset.pattern.permute.xlu0 0
      %619 = vperm.xlu0 %618, %v401
      %v620 = vpop.permute.xlu0 %619
      %623 = vset.pattern.permute.xlu0 0
      %624 = vperm.xlu0 %623, %v402
      %v625 = vpop.permute.xlu0 %624
      %v629 = vunpack.c.l.b16 %v381
      %v630 = vunpack.c.l.b16 %v382
      %v631 = vpack.c.b16 %v630, %v629
      %vm632 = vcmask 31744
      %v634 = vsel %vm632, %v631, 0
      %vm636 = vcmask 1041408
      %v638 = vsel %vm636, %v615, 0
      %v641 = vsel %vm636, %v616, 0
      %643 = vmatprep.subr.bf16.mxu0 %v641
      %644 = vmatpush1.bf16.msra.mxu0 %v638
      %645 = vmatprep.subr.bf16.mxu0 0
      %646 = vmatpush1.bf16.msra.mxu0 0
      %647 = vmatprep.subr.bf16.mxu0 0
      %648 = vmatpush1.bf16.msra.mxu0 0
      %649 = vmatprep.subr.bf16.mxu0 0
      %650 = vmatpush1.bf16.msra.mxu0 0
      %651 = vmatprep.subr.bf16.mxu0 0
      %652 = vmatpush1.bf16.msra.mxu0 0
      %653 = vmatprep.subr.bf16.mxu0 0
      %654 = vmatpush1.bf16.msra.mxu0 0
      %655 = vmatprep.subr.bf16.mxu0 0
      %656 = vmatpush1.bf16.msra.mxu0 0
      %657 = vmatprep.subr.bf16.mxu0 0
      %658 = vmatpush1.bf16.msra.mxu0 0
      %659 = vmatprep.subr.bf16.mxu0 0
      %660 = vmatpush1.bf16.msra.mxu0 0
      %661 = vmatprep.subr.bf16.mxu0 0
      %662 = vmatpush1.bf16.msra.mxu0 0
      %663 = vmatprep.subr.bf16.mxu0 0
      %664 = vmatpush1.bf16.msra.mxu0 0
      %665 = vmatprep.subr.bf16.mxu0 0
      %666 = vmatpush1.bf16.msra.mxu0 0
      %667 = vmatprep.subr.bf16.mxu0 0
      %668 = vmatpush1.bf16.msra.mxu0 0
      %669 = vmatprep.subr.bf16.mxu0 0
      %670 = vmatpush1.bf16.msra.mxu0 0
      %671 = vmatprep.subr.bf16.mxu0 0
      %672 = vmatpush1.bf16.msra.mxu0 0
      %673 = vmatprep.subr.bf16.mxu0 0
      %674 = vmatpush1.bf16.msra.mxu0 0
      %675 = vmatprep.mubr.bf16.mxu0 0
      %676 = vmatmul.mubr.bf16.gmra.mrb[0].mxu0 %v634
      %v677 = vpop.f32.mrb[0].mxu0
      %v678 = vadd.f32 %v620, %v677
      %v679 = vpop.f32.mrb[0].mxu0
      %v680 = vadd.f32 %v620, %v679
      %v681 = vpop.f32.mrb[0].mxu0
      %v682 = vadd.f32 %v625, %v681
      %v683 = vpop.f32.mrb[0].mxu0
      %v684 = vadd.f32 %v625, %v683
      %685 = vdwg.mxu0
      %v686 = vsub.f32 0.0, %v678
      %v687 = vsub.f32 0.0, %v680
      %v688 = vsub.f32 0.0, %v682
      %v689 = vsub.f32 0.0, %v684
      %v690 = vmul.f32 %v686, 1.442695
      %v691 = vpow.pop %v690
      %v692 = vmul.f32 %v687, 1.442695
      %v693 = vpow.pop %v692
      %v694 = vmul.f32 %v688, 1.442695
      %v695 = vpow.pop %v694
      %v696 = vmul.f32 %v689, 1.442695
      %v697 = vpow.pop %v696
      %v698 = vadd.f32 %v691, 1.0
      %v699 = vadd.f32 %v693, 1.0
      %v700 = vadd.f32 %v695, 1.0
      %v701 = vadd.f32 %v697, 1.0
      %v702 = vrcp.pop %v698
      %v703 = vrcp.pop %v699
      %v704 = vrcp.pop %v700
      %v705 = vrcp.pop %v701
      %v706 = vadd.f32 %v554, %v556
      %707 = vadd.xlane.f32.xlu0 %v706
      %v708 = vpop.xlane.xlu0 %707
      %v709 = vadd.f32 %v558, %v560
      %710 = vadd.xlane.f32.xlu0 %v709
      %v711 = vpop.xlane.xlu0 %710
      %v712 = vrcp.pop 256.0
      %v713 = vmul.f32 %v708, %v712
      %v714 = vmul.f32 %v711, %v712
      %v715 = vpack.c.bf16 %v714, %v713
      %717 = vset.pattern.permute.xlu0 0
      %718 = vperm.xlu0 %717, %v414
      %v719 = vpop.permute.xlu0 %718
      %v722 = vsel %vm448, %v376, 0
      %724 = vmatprep.subr.bf16.mxu0 0
      %725 = vmatpush1.bf16.msra.mxu0 %v715
      %726 = vmatprep.subr.bf16.mxu0 0
      %727 = vmatpush1.bf16.msra.mxu0 0
      %728 = vmatprep.subr.bf16.mxu0 0
      %729 = vmatpush1.bf16.msra.mxu0 0
      %730 = vmatprep.subr.bf16.mxu0 0
      %731 = vmatpush1.bf16.msra.mxu0 0
      %732 = vmatprep.subr.bf16.mxu0 0
      %733 = vmatpush1.bf16.msra.mxu0 0
      %734 = vmatprep.subr.bf16.mxu0 0
      %735 = vmatpush1.bf16.msra.mxu0 0
      %736 = vmatprep.subr.bf16.mxu0 0
      %737 = vmatpush1.bf16.msra.mxu0 0
      %738 = vmatprep.subr.bf16.mxu0 0
      %739 = vmatpush1.bf16.msra.mxu0 0
      %740 = vmatprep.subr.bf16.mxu0 0
      %741 = vmatpush1.bf16.msra.mxu0 0
      %742 = vmatprep.subr.bf16.mxu0 0
      %743 = vmatpush1.bf16.msra.mxu0 0
      %744 = vmatprep.subr.bf16.mxu0 0
      %745 = vmatpush1.bf16.msra.mxu0 0
      %746 = vmatprep.subr.bf16.mxu0 0
      %747 = vmatpush1.bf16.msra.mxu0 0
      %748 = vmatprep.subr.bf16.mxu0 0
      %749 = vmatpush1.bf16.msra.mxu0 0
      %750 = vmatprep.subr.bf16.mxu0 0
      %751 = vmatpush1.bf16.msra.mxu0 0
      %752 = vmatprep.subr.bf16.mxu0 0
      %753 = vmatpush1.bf16.msra.mxu0 0
      %754 = vmatprep.subr.bf16.mxu0 0
      %755 = vmatpush1.bf16.msra.mxu0 0
      %756 = vmatprep.mubr.bf16.mxu0 0
      %757 = vmatmul.mubr.bf16.gmra.mrb[0].mxu0 %v722
      %v758 = vpop.f32.mrb[0].mxu0
      %v759 = vadd.f32 %v719, %v758
      %v760 = vpop.f32.mrb[0].mxu0
      %v761 = vpop.f32.mrb[0].mxu0
      %v762 = vpop.f32.mrb[0].mxu0
      %763 = vdwg.mxu0
      %v764 = vmax.f32 %v759, 0.0
      %v765 = vpack.c.bf16 %v764, %v764
      %767 = vset.pattern.permute.xlu0 0
      %768 = vperm.xlu0 %767, %v404
      %v769 = vpop.permute.xlu0 %768
      %772 = vset.pattern.permute.xlu0 0
      %773 = vperm.xlu0 %772, %v405
      %v774 = vpop.permute.xlu0 %773
      %v778 = vunpack.c.l.b16 %v384
      %v779 = vunpack.c.l.b16 %v385
      %v780 = vpack.c.b16 %v779, %v778
      %v782 = vsel %vm632, %v780, 0
      %v785 = vsel %vm636, %v765, 0
      %787 = vmatprep.subr.bf16.mxu0 0
      %788 = vmatpush1.bf16.msra.mxu0 %v785
      %789 = vmatprep.subr.bf16.mxu0 0
      %790 = vmatpush1.bf16.msra.mxu0 0
      %791 = vmatprep.subr.bf16.mxu0 0
      %792 = vmatpush1.bf16.msra.mxu0 0
      %793 = vmatprep.subr.bf16.mxu0 0
      %794 = vmatpush1.bf16.msra.mxu0 0
      %795 = vmatprep.subr.bf16.mxu0 0
      %796 = vmatpush1.bf16.msra.mxu0 0
      %797 = vmatprep.subr.bf16.mxu0 0
      %798 = vmatpush1.bf16.msra.mxu0 0
      %799 = vmatprep.subr.bf16.mxu0 0
      %800 = vmatpush1.bf16.msra.mxu0 0
      %801 = vmatprep.subr.bf16.mxu0 0
      %802 = vmatpush1.bf16.msra.mxu0 0
      %803 = vmatprep.subr.bf16.mxu0 0
      %804 = vmatpush1.bf16.msra.mxu0 0
      %805 = vmatprep.subr.bf16.mxu0 0
      %806 = vmatpush1.bf16.msra.mxu0 0
      %807 = vmatprep.subr.bf16.mxu0 0
      %808 = vmatpush1.bf16.msra.mxu0 0
      %809 = vmatprep.subr.bf16.mxu0 0
      %810 = vmatpush1.bf16.msra.mxu0 0
      %811 = vmatprep.subr.bf16.mxu0 0
      %812 = vmatpush1.bf16.msra.mxu0 0
      %813 = vmatprep.subr.bf16.mxu0 0
      %814 = vmatpush1.bf16.msra.mxu0 0
      %815 = vmatprep.subr.bf16.mxu0 0
      %816 = vmatpush1.bf16.msra.mxu0 0
      %817 = vmatprep.subr.bf16.mxu0 0
      %818 = vmatpush1.bf16.msra.mxu0 0
      %819 = vmatprep.mubr.bf16.mxu0 0
      %820 = vmatmul.mubr.bf16.gmra.mrb[0].mxu0 %v782
      %v821 = vpop.f32.mrb[0].mxu0
      %v822 = vadd.f32 %v769, %v821
      %v823 = vpop.f32.mrb[0].mxu0
      %v824 = vpop.f32.mrb[0].mxu0
      %v825 = vadd.f32 %v774, %v824
      %v826 = vpop.f32.mrb[0].mxu0
      %827 = vdwg.mxu0
      %v828 = vsub.f32 0.0, %v822
      %v829 = vsub.f32 0.0, %v825
      %v830 = vmul.f32 %v828, 1.442695
      %v831 = vpow.pop %v830
      %v832 = vmul.f32 %v829, 1.442695
      %v833 = vpow.pop %v832
      %v834 = vadd.f32 %v831, 1.0
      %v835 = vadd.f32 %v833, 1.0
      %v836 = vrcp.pop %v834
      %v837 = vrcp.pop %v835
      %839 = vset.pattern.permute.xlu0 0
      %840 = vperm.xlu0 %839, %v836
      %v841 = vpop.permute.xlu0 %840
      %844 = vset.pattern.permute.xlu0 0
      %845 = vperm.xlu0 %844, %v837
      %v846 = vpop.permute.xlu0 %845
      %v848 = vadd.f32 %v702, %v841
      %v849 = vadd.f32 %v703, %v841
      %v850 = vadd.f32 %v704, %v846
      %v851 = vadd.f32 %v705, %v846
      %v852 = vadd.f32 %v419, %v848
      %v853 = vadd.f32 %v420, %v849
      %v854 = vadd.f32 %v421, %v850
      %v855 = vadd.f32 %v422, %v851
      %v856 = vadd.f32 %v423, %v848
      %v857 = vadd.f32 %v424, %v849
      %v858 = vadd.f32 %v425, %v850
      %v859 = vadd.f32 %v426, %v851
      %v860 = vpack.c.bf16 %v854, %v852
      %v861 = vpack.c.bf16 %v855, %v853
      %v862 = vpack.c.bf16 %v858, %v856
      %v863 = vpack.c.bf16 %v859, %v857
      %865 = vset.pattern.permute.xlu0 0
      %866 = vperm.xlu0 %865, %v398
      %v867 = vpop.permute.xlu0 %866
      %870 = vset.pattern.permute.xlu0 0
      %871 = vperm.xlu0 %870, %v399
      %v872 = vpop.permute.xlu0 %871
      %v876 = vunpack.c.l.b16 %v372
      %v877 = vunpack.c.l.b16 %v373
      %v878 = vpack.c.b16 %v877, %v876
      %vm879 = vcmask 261120
      %v881 = vsel %vm879, %v878, 0
      %883 = vmatprep.subr.bf16.mxu0 %v861
      %884 = vmatpush1.bf16.msra.mxu0 %v860
      %885 = vmatprep.subr.bf16.mxu0 %v863
      %886 = vmatpush1.bf16.msra.mxu0 %v862
      %887 = vmatprep.subr.bf16.mxu0 0
      %888 = vmatpush1.bf16.msra.mxu0 0
      %889 = vmatprep.subr.bf16.mxu0 0
      %890 = vmatpush1.bf16.msra.mxu0 0
      %891 = vmatprep.subr.bf16.mxu0 0
      %892 = vmatpush1.bf16.msra.mxu0 0
      %893 = vmatprep.subr.bf16.mxu0 0
      %894 = vmatpush1.bf16.msra.mxu0 0
      %895 = vmatprep.subr.bf16.mxu0 0
      %896 = vmatpush1.bf16.msra.mxu0 0
      %897 = vmatprep.subr.bf16.mxu0 0
      %898 = vmatpush1.bf16.msra.mxu0 0
      %899 = vmatprep.subr.bf16.mxu0 0
      %900 = vmatpush1.bf16.msra.mxu0 0
      %901 = vmatprep.subr.bf16.mxu0 0
      %902 = vmatpush1.bf16.msra.mxu0 0
      %903 = vmatprep.subr.bf16.mxu0 0
      %904 = vmatpush1.bf16.msra.mxu0 0
      %905 = vmatprep.subr.bf16.mxu0 0
      %906 = vmatpush1.bf16.msra.mxu0 0
      %907 = vmatprep.subr.bf16.mxu0 0
      %908 = vmatpush1.bf16.msra.mxu0 0
      %909 = vmatprep.subr.bf16.mxu0 0
      %910 = vmatpush1.bf16.msra.mxu0 0
      %911 = vmatprep.subr.bf16.mxu0 0
      %912 = vmatpush1.bf16.msra.mxu0 0
      %913 = vmatprep.subr.bf16.mxu0 0
      %914 = vmatpush1.bf16.msra.mxu0 0
      %915 = vmatprep.mubr.bf16.mxu0 0
      %916 = vmatmul.mubr.bf16.gmra.mrb[0].mxu0 %v881
      %v917 = vpop.f32.mrb[0].mxu0
      %v918 = vadd.f32 %v867, %v917
      %v919 = vpop.f32.mrb[0].mxu0
      %v920 = vadd.f32 %v867, %v919
      %v921 = vpop.f32.mrb[0].mxu0
      %v922 = vadd.f32 %v872, %v921
      %v923 = vpop.f32.mrb[0].mxu0
      %v924 = vadd.f32 %v872, %v923
      %925 = vdwg.mxu0
      %v926 = vpack.c.bf16 %v922, %v918
      %v927 = vpack.c.bf16 %v924, %v920
      %929 = vset.pattern.permute.xlu0 0
      %930 = vperm.xlu0 %929, %v416
      %v931 = vpop.permute.xlu0 %930
      %v934 = vsel %vm448, %v378, 0
      %936 = vmatprep.subr.bf16.mxu0 %v927
      %937 = vmatpush1.bf16.msra.mxu0 %v926
      %938 = vmatprep.subr.bf16.mxu0 0
      %939 = vmatpush1.bf16.msra.mxu0 0
      %940 = vmatprep.subr.bf16.mxu0 0
      %941 = vmatpush1.bf16.msra.mxu0 0
      %942 = vmatprep.subr.bf16.mxu0 0
      %943 = vmatpush1.bf16.msra.mxu0 0
      %944 = vmatprep.subr.bf16.mxu0 0
      %945 = vmatpush1.bf16.msra.mxu0 0
      %946 = vmatprep.subr.bf16.mxu0 0
      %947 = vmatpush1.bf16.msra.mxu0 0
      %948 = vmatprep.subr.bf16.mxu0 0
      %949 = vmatpush1.bf16.msra.mxu0 0
      %950 = vmatprep.subr.bf16.mxu0 0
      %951 = vmatpush1.bf16.msra.mxu0 0
      %952 = vmatprep.subr.bf16.mxu0 0
      %953 = vmatpush1.bf16.msra.mxu0 0
      %954 = vmatprep.subr.bf16.mxu0 0
      %955 = vmatpush1.bf16.msra.mxu0 0
      %956 = vmatprep.subr.bf16.mxu0 0
      %957 = vmatpush1.bf16.msra.mxu0 0
      %958 = vmatprep.subr.bf16.mxu0 0
      %959 = vmatpush1.bf16.msra.mxu0 0
      %960 = vmatprep.subr.bf16.mxu0 0
      %961 = vmatpush1.bf16.msra.mxu0 0
      %962 = vmatprep.subr.bf16.mxu0 0
      %963 = vmatpush1.bf16.msra.mxu0 0
      %964 = vmatprep.subr.bf16.mxu0 0
      %965 = vmatpush1.bf16.msra.mxu0 0
      %966 = vmatprep.subr.bf16.mxu0 0
      %967 = vmatpush1.bf16.msra.mxu0 0
      %968 = vmatprep.mubr.bf16.mxu0 0
      %969 = vmatmul.mubr.bf16.gmra.mrb[0].mxu0 %v934
      %v970 = vpop.f32.mrb[0].mxu0
      %v971 = vadd.f32 %v931, %v970
      %v972 = vpop.f32.mrb[0].mxu0
      %v973 = vadd.f32 %v931, %v972
      %v974 = vpop.f32.mrb[0].mxu0
      %v975 = vpop.f32.mrb[0].mxu0
      %976 = vdwg.mxu0
      %v977 = vmax.f32 %v971, 0.0
      %v978 = vmax.f32 %v973, 0.0
      %v979 = vpack.c.bf16 %v977, %v977
      %v980 = vpack.c.bf16 %v978, %v978
      %982 = vset.pattern.permute.xlu0 0
      %983 = vperm.xlu0 %982, %v407
      %v984 = vpop.permute.xlu0 %983
      %987 = vset.pattern.permute.xlu0 0
      %988 = vperm.xlu0 %987, %v408
      %v989 = vpop.permute.xlu0 %988
      %v993 = vunpack.c.l.b16 %v387
      %v994 = vunpack.c.l.b16 %v388
      %v995 = vpack.c.b16 %v994, %v993
      %v997 = vsel %vm632, %v995, 0
      %v1000 = vsel %vm636, %v979, 0
      %v1003 = vsel %vm636, %v980, 0
      %1005 = vmatprep.subr.bf16.mxu0 %v1003
      %1006 = vmatpush1.bf16.msra.mxu0 %v1000
      %1007 = vmatprep.subr.bf16.mxu0 0
      %1008 = vmatpush1.bf16.msra.mxu0 0
      %1009 = vmatprep.subr.bf16.mxu0 0
      %1010 = vmatpush1.bf16.msra.mxu0 0
      %1011 = vmatprep.subr.bf16.mxu0 0
      %1012 = vmatpush1.bf16.msra.mxu0 0
      %1013 = vmatprep.subr.bf16.mxu0 0
      %1014 = vmatpush1.bf16.msra.mxu0 0
      %1015 = vmatprep.subr.bf16.mxu0 0
      %1016 = vmatpush1.bf16.msra.mxu0 0
      %1017 = vmatprep.subr.bf16.mxu0 0
      %1018 = vmatpush1.bf16.msra.mxu0 0
      %1019 = vmatprep.subr.bf16.mxu0 0
      %1020 = vmatpush1.bf16.msra.mxu0 0
      %1021 = vmatprep.subr.bf16.mxu0 0
      %1022 = vmatpush1.bf16.msra.mxu0 0
      %1023 = vmatprep.subr.bf16.mxu0 0
      %1024 = vmatpush1.bf16.msra.mxu0 0
      %1025 = vmatprep.subr.bf16.mxu0 0
      %1026 = vmatpush1.bf16.msra.mxu0 0
      %1027 = vmatprep.subr.bf16.mxu0 0
      %1028 = vmatpush1.bf16.msra.mxu0 0
      %1029 = vmatprep.subr.bf16.mxu0 0
      %1030 = vmatpush1.bf16.msra.mxu0 0
      %1031 = vmatprep.subr.bf16.mxu0 0
      %1032 = vmatpush1.bf16.msra.mxu0 0
      %1033 = vmatprep.subr.bf16.mxu0 0
      %1034 = vmatpush1.bf16.msra.mxu0 0
      %1035 = vmatprep.subr.bf16.mxu0 0
      %1036 = vmatpush1.bf16.msra.mxu0 0
      %1037 = vmatprep.mubr.bf16.mxu0 0
      %1038 = vmatmul.mubr.bf16.gmra.mrb[0].mxu0 %v997
      %v1039 = vpop.f32.mrb[0].mxu0
      %v1040 = vadd.f32 %v984, %v1039
      %v1041 = vpop.f32.mrb[0].mxu0
      %v1042 = vadd.f32 %v984, %v1041
      %v1043 = vpop.f32.mrb[0].mxu0
      %v1044 = vadd.f32 %v989, %v1043
      %v1045 = vpop.f32.mrb[0].mxu0
      %v1046 = vadd.f32 %v989, %v1045
      %1047 = vdwg.mxu0
      %v1048 = vadd.f32 %v918, %v920
      %1049 = vadd.xlane.f32.xlu0 %v1048
      %v1050 = vpop.xlane.xlu0 %1049
      %v1051 = vadd.f32 %v922, %v924
      %1052 = vadd.xlane.f32.xlu0 %v1051
      %v1053 = vpop.xlane.xlu0 %1052
      %v1054 = vmul.f32 %v1050, %v712
      %v1055 = vmul.f32 %v1053, %v712
      %v1056 = vpack.c.bf16 %v1055, %v1054
      %1058 = vset.pattern.permute.xlu0 0
      %1059 = vperm.xlu0 %1058, %v418
      %v1060 = vpop.permute.xlu0 %1059
      %v1063 = vsel %vm448, %v380, 0
      %1065 = vmatprep.subr.bf16.mxu0 0
      %1066 = vmatpush1.bf16.msra.mxu0 %v1056
      %1067 = vmatprep.subr.bf16.mxu0 0
      %1068 = vmatpush1.bf16.msra.mxu0 0
      %1069 = vmatprep.subr.bf16.mxu0 0
      %1070 = vmatpush1.bf16.msra.mxu0 0
      %1071 = vmatprep.subr.bf16.mxu0 0
      %1072 = vmatpush1.bf16.msra.mxu0 0
      %1073 = vmatprep.subr.bf16.mxu0 0
      %1074 = vmatpush1.bf16.msra.mxu0 0
      %1075 = vmatprep.subr.bf16.mxu0 0
      %1076 = vmatpush1.bf16.msra.mxu0 0
      %1077 = vmatprep.subr.bf16.mxu0 0
      %1078 = vmatpush1.bf16.msra.mxu0 0
      %1079 = vmatprep.subr.bf16.mxu0 0
      %1080 = vmatpush1.bf16.msra.mxu0 0
      %1081 = vmatprep.subr.bf16.mxu0 0
      %1082 = vmatpush1.bf16.msra.mxu0 0
      %1083 = vmatprep.subr.bf16.mxu0 0
      %1084 = vmatpush1.bf16.msra.mxu0 0
      %1085 = vmatprep.subr.bf16.mxu0 0
      %1086 = vmatpush1.bf16.msra.mxu0 0
      %1087 = vmatprep.subr.bf16.mxu0 0
      %1088 = vmatpush1.bf16.msra.mxu0 0
      %1089 = vmatprep.subr.bf16.mxu0 0
      %1090 = vmatpush1.bf16.msra.mxu0 0
      %1091 = vmatprep.subr.bf16.mxu0 0
      %1092 = vmatpush1.bf16.msra.mxu0 0
      %1093 = vmatprep.subr.bf16.mxu0 0
      %1094 = vmatpush1.bf16.msra.mxu0 0
      %1095 = vmatprep.subr.bf16.mxu0 0
      %1096 = vmatpush1.bf16.msra.mxu0 0
      %1097 = vmatprep.mubr.bf16.mxu0 0
      %1098 = vmatmul.mubr.bf16.gmra.mrb[0].mxu0 %v1063
      %v1099 = vpop.f32.mrb[0].mxu0
      %v1100 = vadd.f32 %v1060, %v1099
      %v1101 = vpop.f32.mrb[0].mxu0
      %v1102 = vpop.f32.mrb[0].mxu0
      %v1103 = vpop.f32.mrb[0].mxu0
      %1104 = vdwg.mxu0
      %v1105 = vmax.f32 %v1100, 0.0
      %v1106 = vpack.c.bf16 %v1105, %v1105
      %1108 = vset.pattern.permute.xlu0 0
      %1109 = vperm.xlu0 %1108, %v410
      %v1110 = vpop.permute.xlu0 %1109
      %1113 = vset.pattern.permute.xlu0 0
      %1114 = vperm.xlu0 %1113, %v411
      %v1115 = vpop.permute.xlu0 %1114
      %v1119 = vunpack.c.l.b16 %v390
      %v1120 = vunpack.c.l.b16 %v391
      %v1121 = vpack.c.b16 %v1120, %v1119
      %v1123 = vsel %vm632, %v1121, 0
      %v1126 = vsel %vm636, %v1106, 0
      %1128 = vmatprep.subr.bf16.mxu0 0
      %1129 = vmatpush1.bf16.msra.mxu0 %v1126
      %1130 = vmatprep.subr.bf16.mxu0 0
      %1131 = vmatpush1.bf16.msra.mxu0 0
      %1132 = vmatprep.subr.bf16.mxu0 0
      %1133 = vmatpush1.bf16.msra.mxu0 0
      %1134 = vmatprep.subr.bf16.mxu0 0
      %1135 = vmatpush1.bf16.msra.mxu0 0
      %1136 = vmatprep.subr.bf16.mxu0 0
      %1137 = vmatpush1.bf16.msra.mxu0 0
      %1138 = vmatprep.subr.bf16.mxu0 0
      %1139 = vmatpush1.bf16.msra.mxu0 0
      %1140 = vmatprep.subr.bf16.mxu0 0
      %1141 = vmatpush1.bf16.msra.mxu0 0
      %1142 = vmatprep.subr.bf16.mxu0 0
      %1143 = vmatpush1.bf16.msra.mxu0 0
      %1144 = vmatprep.subr.bf16.mxu0 0
      %1145 = vmatpush1.bf16.msra.mxu0 0
      %1146 = vmatprep.subr.bf16.mxu0 0
      %1147 = vmatpush1.bf16.msra.mxu0 0
      %1148 = vmatprep.subr.bf16.mxu0 0
      %1149 = vmatpush1.bf16.msra.mxu0 0
      %1150 = vmatprep.subr.bf16.mxu0 0
      %1151 = vmatpush1.bf16.msra.mxu0 0
      %1152 = vmatprep.subr.bf16.mxu0 0
      %1153 = vmatpush1.bf16.msra.mxu0 0
      %1154 = vmatprep.subr.bf16.mxu0 0
      %1155 = vmatpush1.bf16.msra.mxu0 0
      %1156 = vmatprep.subr.bf16.mxu0 0
      %1157 = vmatpush1.bf16.msra.mxu0 0
      %1158 = vmatprep.subr.bf16.mxu0 0
      %1159 = vmatpush1.bf16.msra.mxu0 0
      %1160 = vmatprep.mubr.bf16.mxu0 0
      %1161 = vmatmul.mubr.bf16.gmra.mrb[0].mxu0 %v1123
      %v1162 = vpop.f32.mrb[0].mxu0
      %v1163 = vadd.f32 %v1110, %v1162
      %v1164 = vpop.f32.mrb[0].mxu0
      %v1165 = vpop.f32.mrb[0].mxu0
      %v1166 = vadd.f32 %v1115, %v1165
      %v1167 = vpop.f32.mrb[0].mxu0
      %1168 = vdwg.mxu0
      %1170 = vset.pattern.permute.xlu0 0
      %1171 = vperm.xlu0 %1170, %v1163
      %v1172 = vpop.permute.xlu0 %1171
      %1175 = vset.pattern.permute.xlu0 0
      %1176 = vperm.xlu0 %1175, %v1166
      %v1177 = vpop.permute.xlu0 %1176
      %v1179 = vadd.f32 %v1040, %v1172
      %v1180 = vadd.f32 %v1042, %v1172
      %v1181 = vadd.f32 %v1044, %v1177
      %v1182 = vadd.f32 %v1046, %v1177
      %v1183 = vsub.f32 0.0, %v1179
      %v1184 = vsub.f32 0.0, %v1180
      %v1185 = vsub.f32 0.0, %v1181
      %v1186 = vsub.f32 0.0, %v1182
      %v1187 = vmul.f32 %v1183, 1.442695
      %v1188 = vpow.pop %v1187
      %v1189 = vmul.f32 %v1184, 1.442695
      %v1190 = vpow.pop %v1189
      %v1191 = vmul.f32 %v1185, 1.442695
      %v1192 = vpow.pop %v1191
      %v1193 = vmul.f32 %v1186, 1.442695
      %v1194 = vpow.pop %v1193
      %v1195 = vadd.f32 %v1188, 1.0
      %v1196 = vadd.f32 %v1190, 1.0
      %v1197 = vadd.f32 %v1192, 1.0
      %v1198 = vadd.f32 %v1194, 1.0
      %v1199 = vrcp.pop %v1195
      %v1200 = vrcp.pop %v1196
      %v1201 = vrcp.pop %v1197
      %v1202 = vrcp.pop %v1198
      %v1203 = vmul.f32 %v419, %v1199
      %v1204 = vmul.f32 %v420, %v1200
      %v1205 = vmul.f32 %v421, %v1201
      %v1206 = vmul.f32 %v422, %v1202
      %1207 = vst [vmem:[%s360] sm:$0xff] %v1203
      %1208 = vst [vmem:[%s360 + $0x8] sm:$0xff] %v1204
      %1209 = vst [vmem:[%s360 + $0x10] sm:$0xff] %v1205
      %1210 = vst [vmem:[%s360 + $0x18] sm:$0xff] %v1206
      %v1211 = vld [vmem:[%s355] sm:$0xff]
      %v1212 = vld [vmem:[%s355 + $0x8] sm:$0xff]
      %v1213 = vld [vmem:[%s355 + $0x10] sm:$0xff]
      %v1214 = vld [vmem:[%s355 + $0x18] sm:$0xff]
      %v1215 = vsub.f32 1.0, %v1199
      %v1216 = vsub.f32 1.0, %v1200
      %v1217 = vsub.f32 1.0, %v1201
      %v1218 = vsub.f32 1.0, %v1202
      %v1219 = vmul.f32 %v1211, %v1215
      %v1220 = vmul.f32 %v1212, %v1216
      %v1221 = vmul.f32 %v1213, %v1217
      %v1222 = vmul.f32 %v1214, %v1218
      %1223 = vst [vmem:[%s365] sm:$0xff] %v1219
      %1224 = vst [vmem:[%s365 + $0x8] sm:$0xff] %v1220
      %1225 = vst [vmem:[%s365 + $0x10] sm:$0xff] %v1221
      %1226 = vst [vmem:[%s365 + $0x18] sm:$0xff] %v1222
      %p1227 = scmp.lt.s32.totalorder %s21, 1
      %s1228 = scalar_select %p1227, %s21, 1
      %s1229 = smul.addr %s1228, 4
      %s1230 = smul.addr %s1229, 8
      %s1231 = scalar_lea.vmem %s8, %s1230
      %p1232 = scmp.lt.s32.totalorder %s21, 1
      %s1233 = scalar_select %p1232, %s21, 1
      %s1234 = smul.addr %s1233, 4
      %s1235 = smul.addr %s1234, 8
      %s1236 = scalar_lea.vmem %s9, %s1235
      // Predicated region
      $region53: #{cmdfb_forward.1} parent=51 // pred_check
        %p1237 = pneg %p217
      $region54: #{cmdfb_forward.1} parent=51 // pred_check_branch
        %1239 = sbr.rel (%p1237) target = $region56
      $region55: #{cmdfb_forward.1} parent=51 // pred_region
        _
      $region56: #{cmdfb_forward.1} parent=51 // pred_fallthru
        _
      // Predicated region
      $region57: #{cmdfb_forward.1} parent=51 // pred_check
        %p1240 = pneg %p243
      $region58: #{cmdfb_forward.1} parent=51 // pred_check_branch
        %1242 = sbr.rel (%p1240) target = $region60
      $region59: #{cmdfb_forward.1} parent=51 // pred_region
        _
      $region60: #{cmdfb_forward.1} parent=51 // pred_fallthru
        _
    $region52: #{cmdfb_forward.1} parent=5 // pred_fallthru
      _
    %p1243 = scmp.le.s32.totalorder 2, %s16
    // Predicated region
    $region61: #{cmdfb_forward.1} parent=5 // pred_check
      %p1244 = pneg %p1243
    $region62: #{cmdfb_forward.1} parent=5 // pred_check_branch
      %1246 = sbr.rel (%p1244) target = $region64
    $region63: #{cmdfb_forward.1} parent=5 // pred_region
      %s1247 = ssub.s32 %s16, 2
      // Predicated region
      $region65: #{cmdfb_forward.1} parent=63 // pred_check
        %p1248 = pneg %p223
      $region66: #{cmdfb_forward.1} parent=63 // pred_check_branch
        %1250 = sbr.rel (%p1248) target = $region68
      $region67: #{cmdfb_forward.1} parent=63 // pred_region
        %p1251 = scmp.lt.s32.totalorder %s22, 1
        %s1252 = scalar_select %p1251, %s22, 1
        %s1253 = smul.addr %s1252, 4
        %s1254 = smul.addr %s1253, 8
        %s1255 = scalar_lea.vmem %s8, %s1254
      $region68: #{cmdfb_forward.1} parent=63 // pred_fallthru
        _
      // Predicated region
      $region69: #{cmdfb_forward.1} parent=63 // pred_check
        %p1256 = pneg %p249
      $region70: #{cmdfb_forward.1} parent=63 // pred_check_branch
        %1258 = sbr.rel (%p1256) target = $region72
      $region71: #{cmdfb_forward.1} parent=63 // pred_region
        %p1259 = scmp.lt.s32.totalorder %s22, 1
        %s1260 = scalar_select %p1259, %s22, 1
        %s1261 = smul.addr %s1260, 4
        %s1262 = smul.addr %s1261, 8
        %s1263 = scalar_lea.vmem %s9, %s1262
      $region72: #{cmdfb_forward.1} parent=63 // pred_fallthru
        _
    $region64: #{cmdfb_forward.1} parent=5 // pred_fallthru
      _
  $region6: #{cmdfb_forward.1} parent=0 // loop_footer
    %s20 = sadd.s32 1, %s16
  $region7: #{cmdfb_forward.1} parent=0 // loop_footer_branch
    %15 = sbr.rel target = $region3
  $region8: #{cmdfb_forward.1} parent=0 // loop_exit
    _

</llo_original>
